<compile_context>
chip_gen: v7x
topology: tpu7x:2x2x1
jax: 0.10.0
libtpu: 0.0.40
codegen_flags: <defaults>
</compile_context>

<pallas_src>
import functools

import jax
import jax.numpy as jnp
from jax.experimental import pallas as pl
from jax.experimental.pallas import tpu as pltpu


# ------------------------------ helpers -------------------------------------

def _round_up(n, m):
    return ((n + m - 1) // m) * m


# ----------------------------- Pallas kernel --------------------------------

def _mlp_kernel(x_ref,
                w1_ref, a1_ref, c1_ref,
                w2_ref, a2_ref, c2_ref,
                w3_ref, a3_ref, c3_ref,
                w4_ref, a4_ref, c4_ref,
                wo_ref, bo_ref,
                out_ref):
    """Fused 4-layer MLP (+folded BN, LeakyReLU 0.2) + output projection.

    Weights are bf16, activations flow in f32; every matmul feeds the MXU with
    bf16 operands and accumulates in f32.  The folded-BN affine and LeakyReLU
    epilogue run in f32 on the VPU.
    """

    def layer(h, w_ref, a_ref, c_ref):
        z = jnp.dot(h.astype(jnp.bfloat16), w_ref[...],
                    preferred_element_type=jnp.float32)
        z = z * a_ref[...] + c_ref[...]
        return jnp.maximum(z, 0.2 * z)          # LeakyReLU(0.2)

    h = x_ref[...].astype(jnp.float32)
    h = layer(h, w1_ref, a1_ref, c1_ref)
    h = layer(h, w2_ref, a2_ref, c2_ref)
    h = layer(h, w3_ref, a3_ref, c3_ref)
    h = layer(h, w4_ref, a4_ref, c4_ref)
    out_ref[...] = (
        jnp.dot(h.astype(jnp.bfloat16), wo_ref[...],
                preferred_element_type=jnp.float32)
        + bo_ref[...]
    )


# -------------------------- one-time parameter packing ----------------------

def pack_params(params, eps=1e-5):
    """Fold BatchNorm (eval) into per-feature affine, pad to lane multiples,
    and cast weights to bf16.  Run ONCE, outside the per-call path."""
    F, H = params["w1"].shape
    O = params["wo"].shape[1]
    F_pad = _round_up(F, 128)
    H_pad = _round_up(H, 128)
    O_pad = _round_up(O, 128)

    def pad2(w, r, c):
        return jnp.zeros((r, c), jnp.float32).at[:w.shape[0], :w.shape[1]].set(w)

    def pad_row(v, c):
        return jnp.zeros((1, c), jnp.float32).at[0, :v.shape[0]].set(v)

    def fold(w, b, g, be, m, v, in_pad, out_pad):
        # BN(eval) after linear:  (x@W + b) -> (x@W)*s + ((b - mean)*s + beta)
        s = g / jnp.sqrt(v + eps)
        scale = pad_row(s, out_pad)
        shift = pad_row((b - m) * s + be, out_pad)
        wp = pad2(w, in_pad, out_pad).astype(jnp.bfloat16)
        return wp, scale, shift

    p = {}
    p["w1"], p["a1"], p["c1"] = fold(params["w1"], params["b1"], params["g1"],
                                     params["be1"], params["m1"], params["v1"],
                                     F_pad, H_pad)
    p["w2"], p["a2"], p["c2"] = fold(params["w2"], params["b2"], params["g2"],
                                     params["be2"], params["m2"], params["v2"],
                                     H_pad, H_pad)
    p["w3"], p["a3"], p["c3"] = fold(params["w3"], params["b3"], params["g3"],
                                     params["be3"], params["m3"], params["v3"],
                                     H_pad, H_pad)
    p["w4"], p["a4"], p["c4"] = fold(params["w4"], params["b4"], params["g4"],
                                     params["be4"], params["m4"], params["v4"],
                                     H_pad, H_pad)
    p["wo"] = pad2(params["wo"], H_pad, O_pad).astype(jnp.bfloat16)
    p["bo"] = pad_row(params["bo"], O_pad)
    return p


# -------------------------------- forward -----------------------------------

@functools.partial(jax.jit, static_argnames=("out_size", "tile_m"))
def smirk_emo_forward(smirk_features, packed, *, out_size, tile_m=128):
    """smirk_features: (B, input_size) float32.  Returns (valence, arousal, expression)."""
    B, F = smirk_features.shape
    F_pad, H_pad = packed["w1"].shape
    O_pad = packed["wo"].shape[1]
    assert F <= F_pad and out_size <= O_pad

    # Batch tiling (sublane dim must be a multiple of 8).
    tm = _round_up(min(tile_m, B), 8)
    B_pad = _round_up(B, tm)
    grid = (B_pad // tm,)

    x_p = jnp.pad(smirk_features.astype(jnp.float32),
                  ((0, B_pad - B), (0, F_pad - F)))

    batch_map = lambda i: (i, 0)   # x / out tiles follow the batch axis
    const_map = lambda i: (0, 0)   # weights resident across batch tiles

    wspec = lambda r, c: pl.BlockSpec((r, c), const_map)
    vspec = lambda c: pl.BlockSpec((1, c), const_map)

    in_specs = [
        pl.BlockSpec((tm, F_pad), batch_map),
        wspec(F_pad, H_pad), vspec(H_pad), vspec(H_pad),
        wspec(H_pad, H_pad), vspec(H_pad), vspec(H_pad),
        wspec(H_pad, H_pad), vspec(H_pad), vspec(H_pad),
        wspec(H_pad, H_pad), vspec(H_pad), vspec(H_pad),
        wspec(H_pad, O_pad), vspec(O_pad),
    ]
    out_specs = pl.BlockSpec((tm, O_pad), batch_map)

    # Explicit VMEM budget sized from the real operand footprint (2x for
    # double-buffering + margin); at the module default hidden=2048 the bf16
    # weights alone (~26 MiB) exceed the 32 MiB default scoped limit.
    weight_bytes = 2 * (F_pad * H_pad + 3 * H_pad * H_pad + H_pad * O_pad)
    affine_bytes = 4 * (8 * H_pad + O_pad)
    act_bytes = 4 * tm * (F_pad + H_pad + O_pad)
    vmem_limit = int(min(128 * 1024 * 1024,
                         max(32 * 1024 * 1024,
                             2 * (weight_bytes + affine_bytes + act_bytes)
                             + (8 << 20))))

    out_pad = pl.pallas_call(
        _mlp_kernel,
        out_shape=jax.ShapeDtypeStruct((B_pad, O_pad), jnp.float32),
        grid_spec=pltpu.PrefetchScalarGridSpec(
            num_scalar_prefetch=0,
            grid=grid,
            in_specs=in_specs,
            out_specs=out_specs,
        ),
        compiler_params=pltpu.CompilerParams(
            dimension_semantics=("parallel",),
            vmem_limit_bytes=vmem_limit,
        ),
    )(x_p,
      packed["w1"], packed["a1"], packed["c1"],
      packed["w2"], packed["a2"], packed["c2"],
      packed["w3"], packed["a3"], packed["c3"],
      packed["w4"], packed["a4"], packed["c4"],
      packed["wo"], packed["bo"])

    output = out_pad[:B, :out_size]
    expression = output[:, :8]
    arousal = output[:, 8]
    valence = output[:, 9]
    return valence, arousal, expression


# ---------------------------- parameter setup --------------------------------

def init_params(key, input_size, hidden_size, output_size):
    ks = jax.random.split(key, 32)
    it = iter(range(32))

    def lin(in_f, out_f):
        # stored as (in, out) == torch weight.T
        w = 0.02 * jax.random.normal(ks[next(it)], (in_f, out_f), jnp.float32)
        b = 0.01 * jax.random.normal(ks[next(it)], (out_f,), jnp.float32)
        return w, b

    def bn(n):
        g = 1.0 + 0.1 * jax.random.normal(ks[next(it)], (n,), jnp.float32)
        be = 0.1 * jax.random.normal(ks[next(it)], (n,), jnp.float32)
        m = 0.1 * jax.random.normal(ks[next(it)], (n,), jnp.float32)
        v = jnp.abs(1.0 + 0.1 * jax.random.normal(ks[next(it)], (n,), jnp.float32))
        return g, be, m, v

    p = {}
    p["w1"], p["b1"] = lin(input_size, hidden_size)
    p["g1"], p["be1"], p["m1"], p["v1"] = bn(hidden_size)
    p["w2"], p["b2"] = lin(hidden_size, hidden_size)
    p["g2"], p["be2"], p["m2"], p["v2"] = bn(hidden_size)
    p["w3"], p["b3"] = lin(hidden_size, hidden_size)
    p["g3"], p["be3"], p["m3"], p["v3"] = bn(hidden_size)
    p["w4"], p["b4"] = lin(hidden_size, hidden_size)
    p["g4"], p["be4"], p["m4"], p["v4"] = bn(hidden_size)
    p["wo"], p["bo"] = lin(hidden_size, output_size)
    return p


# ------------------------------ references ----------------------------------

def reference_forward_f32(x, params):
    """Exact (f32) reproduction of the PyTorch module in eval mode."""
    eps = 1e-5

    def layer(h, w, b, g, be, m, v):
        z = h @ w + b
        z = g * (z - m) / jnp.sqrt(v + eps) + be
        return jnp.where(z > 0, z, 0.2 * z)

    h = layer(x, params["w1"], params["b1"], params["g1"], params["be1"],
              params["m1"], params["v1"])
    h = layer(h, params["w2"], params["b2"], params["g2"], params["be2"],
              params["m2"], params["v2"])
    h = layer(h, params["w3"], params["b3"], params["g3"], params["be3"],
              params["m3"], params["v3"])
    h = layer(h, params["w4"], params["b4"], params["g4"], params["be4"],
              params["m4"], params["v4"])
    out = h @ params["wo"] + params["bo"]
    return out[:, 9], out[:, 8], out[:, :8]


def reference_forward_packed(x, packed, out_size):
    """Pure-JAX reference using the SAME folded/padded bf16 parameters as the
    kernel (precision-matched check)."""
    F_pad = packed["w1"].shape[0]
    xp = jnp.pad(x.astype(jnp.float32), ((0, 0), (0, F_pad - x.shape[1])))

    def layer(h, w, a, c):
        z = jnp.dot(h.astype(jnp.bfloat16), w, preferred_element_type=jnp.float32)
        z = z * a + c
        return jnp.maximum(z, 0.2 * z)

    h = layer(xp, packed["w1"], packed["a1"], packed["c1"])
    h = layer(h, packed["w2"], packed["a2"], packed["c2"])
    h = layer(h, packed["w3"], packed["a3"], packed["c3"])
    h = layer(h, packed["w4"], packed["a4"], packed["c4"])
    out = jnp.dot(h.astype(jnp.bfloat16), packed["wo"],
                  preferred_element_type=jnp.float32) + packed["bo"]
    out = out[:, :out_size]
    return out[:, 9], out[:, 8], out[:, :8]


# --------------------------------- main ---------------------------------------

if __name__ == "__main__":
    INPUT_SIZE = 358     # as in the module default
    HIDDEN_SIZE = 256    # small hidden size for the demo (module default: 2048)
    OUTPUT_SIZE = 10
    BATCH = 16
    TILE_M = 8           # small batch tile so the demo exercises >1 grid step

    key = jax.random.PRNGKey(0)
    k_params, k_data = jax.random.split(key)
    params = init_params(k_params, INPUT_SIZE, HIDDEN_SIZE, OUTPUT_SIZE)
    packed = pack_params(params)         # one-time packing (fold BN, pad, bf16)

    # Emulate the `smirk_feature` dict-of-lists input: each entry is a list of
    # per-sample scalars of shape (B,); stacking dim=1 then concatenating along
    # dim=1 yields the (B, 358) feature matrix, exactly as in the PyTorch code.
    feat_counts = {"pose": 58, "shape": 200, "expression": 100}  # sums to 358
    data_keys = jax.random.split(k_data, sum(feat_counts.values()))
    ki = iter(data_keys)
    smirk_feature = {
        name: [jax.random.normal(next(ki), (BATCH,), jnp.float32)
               for _ in range(n)]
        for name, n in feat_counts.items()
    }
    smirk_features_list = [
        jnp.stack([f.astype(jnp.float32) for f in smirk_feature[k]], axis=1)
        for k in smirk_feature
    ]
    smirk_features = jnp.concatenate(smirk_features_list, axis=1)  # (B, 358)
    assert smirk_features.shape == (BATCH, INPUT_SIZE)

    valence, arousal, expression = smirk_emo_forward(
        smirk_features, packed, out_size=OUTPUT_SIZE, tile_m=TILE_M)
    jax.block_until_ready((valence, arousal, expression))

    assert valence.shape == (BATCH,)
    assert arousal.shape == (BATCH,)
    assert expression.shape == (BATCH, 8)

    # Precision-matched reference (same bf16 weights / folded BN): tight check.
    v_p, a_p, e_p = reference_forward_packed(smirk_features, packed, OUTPUT_SIZE)
    assert jnp.allclose(valence, v_p, atol=2e-3, rtol=2e-3)
    assert jnp.allclose(arousal, a_p, atol=2e-3, rtol=2e-3)
    assert jnp.allclose(expression, e_p, atol=2e-3, rtol=2e-3)

    # Full-f32 module reference: loose check (bf16 weight storage).
    v_r, a_r, e_r = reference_forward_f32(smirk_features, params)
    assert jnp.allclose(valence, v_r, atol=3e-2, rtol=3e-2)
    assert jnp.allclose(arousal, a_r, atol=3e-2, rtol=3e-2)
    assert jnp.allclose(expression, e_r, atol=3e-2, rtol=3e-2)

    print("KERNEL_OK")
</pallas_src>

<mosaic_0001>
module attributes {stable_mosaic.version = 11 : i64} {
  func.func @_mlp_kernel(%arg0: i32, %arg1: memref<8x384xf32, #tpu.memory_space<vmem>>, %arg2: memref<384x256xbf16, #tpu.memory_space<vmem>>, %arg3: memref<1x256xf32, #tpu.memory_space<vmem>>, %arg4: memref<1x256xf32, #tpu.memory_space<vmem>>, %arg5: memref<256x256xbf16, #tpu.memory_space<vmem>>, %arg6: memref<1x256xf32, #tpu.memory_space<vmem>>, %arg7: memref<1x256xf32, #tpu.memory_space<vmem>>, %arg8: memref<256x256xbf16, #tpu.memory_space<vmem>>, %arg9: memref<1x256xf32, #tpu.memory_space<vmem>>, %arg10: memref<1x256xf32, #tpu.memory_space<vmem>>, %arg11: memref<256x256xbf16, #tpu.memory_space<vmem>>, %arg12: memref<1x256xf32, #tpu.memory_space<vmem>>, %arg13: memref<1x256xf32, #tpu.memory_space<vmem>>, %arg14: memref<256x128xbf16, #tpu.memory_space<vmem>>, %arg15: memref<1x128xf32, #tpu.memory_space<vmem>>, %arg16: memref<8x128xf32, #tpu.memory_space<vmem>>) attributes {dimension_semantics = [#tpu.dimension_semantics<parallel>], iteration_bounds = array<i64: 2>, scalar_prefetch = 0 : i64, scratch_operands = 0 : i64, tpu.core_type = #tpu.core_type<tc>, window_params = [{transform_indices = @transform_0, window_bounds = array<i64: 8, 384>}, {pipeline_mode = #tpu.pipeline_mode<synchronous>, transform_indices = @transform_1, window_bounds = array<i64: 384, 256>}, {pipeline_mode = #tpu.pipeline_mode<synchronous>, transform_indices = @transform_2, window_bounds = array<i64: 1, 256>}, {pipeline_mode = #tpu.pipeline_mode<synchronous>, transform_indices = @transform_3, window_bounds = array<i64: 1, 256>}, {pipeline_mode = #tpu.pipeline_mode<synchronous>, transform_indices = @transform_4, window_bounds = array<i64: 256, 256>}, {pipeline_mode = #tpu.pipeline_mode<synchronous>, transform_indices = @transform_5, window_bounds = array<i64: 1, 256>}, {pipeline_mode = #tpu.pipeline_mode<synchronous>, transform_indices = @transform_6, window_bounds = array<i64: 1, 256>}, {pipeline_mode = #tpu.pipeline_mode<synchronous>, transform_indices = @transform_7, window_bounds = array<i64: 256, 256>}, {pipeline_mode = #tpu.pipeline_mode<synchronous>, transform_indices = @transform_8, window_bounds = array<i64: 1, 256>}, {pipeline_mode = #tpu.pipeline_mode<synchronous>, transform_indices = @transform_9, window_bounds = array<i64: 1, 256>}, {pipeline_mode = #tpu.pipeline_mode<synchronous>, transform_indices = @transform_10, window_bounds = array<i64: 256, 256>}, {pipeline_mode = #tpu.pipeline_mode<synchronous>, transform_indices = @transform_11, window_bounds = array<i64: 1, 256>}, {pipeline_mode = #tpu.pipeline_mode<synchronous>, transform_indices = @transform_12, window_bounds = array<i64: 1, 256>}, {pipeline_mode = #tpu.pipeline_mode<synchronous>, transform_indices = @transform_13, window_bounds = array<i64: 256, 128>}, {pipeline_mode = #tpu.pipeline_mode<synchronous>, transform_indices = @transform_14, window_bounds = array<i64: 1, 128>}, {transform_indices = @transform_15, window_bounds = array<i64: 8, 128>}]} {
    %c0 = arith.constant 0 : index
    %c0_0 = arith.constant 0 : index
    %0 = vector.load %arg1[%c0, %c0_0] : memref<8x384xf32, #tpu.memory_space<vmem>>, vector<8x384xf32>
    %1 = arith.truncf %0 : vector<8x384xf32> to vector<8x384xbf16>
    %c0_1 = arith.constant 0 : index
    %c0_2 = arith.constant 0 : index
    %2 = vector.load %arg2[%c0_1, %c0_2] : memref<384x256xbf16, #tpu.memory_space<vmem>>, vector<384x256xbf16>
    %cst = arith.constant dense<0.000000e+00> : vector<8x256xf32>
    %3 = tpu.matmul %1, %2, %cst {dimension_numbers = #tpu.dot_dimension_numbers<[1], [0], [0], [1], [0, 0, 1, 1], [], []>} : vector<8x384xbf16>, vector<384x256xbf16>, vector<8x256xf32> -> vector<8x256xf32>
    %c0_3 = arith.constant 0 : index
    %c0_4 = arith.constant 0 : index
    %4 = vector.load %arg3[%c0_3, %c0_4] : memref<1x256xf32, #tpu.memory_space<vmem>>, vector<1x256xf32>
    %5 = vector.broadcast %4 : vector<1x256xf32> to vector<8x256xf32>
    %6 = arith.mulf %3, %5 : vector<8x256xf32>
    %c0_5 = arith.constant 0 : index
    %c0_6 = arith.constant 0 : index
    %7 = vector.load %arg4[%c0_5, %c0_6] : memref<1x256xf32, #tpu.memory_space<vmem>>, vector<1x256xf32>
    %8 = vector.broadcast %7 : vector<1x256xf32> to vector<8x256xf32>
    %9 = arith.addf %6, %8 : vector<8x256xf32>
    %cst_7 = arith.constant 2.000000e-01 : f32
    %10 = vector.broadcast %cst_7 : f32 to vector<8x256xf32>
    %11 = arith.mulf %10, %9 : vector<8x256xf32>
    %12 = arith.maximumf %9, %11 : vector<8x256xf32>
    %13 = arith.truncf %12 : vector<8x256xf32> to vector<8x256xbf16>
    %c0_8 = arith.constant 0 : index
    %c0_9 = arith.constant 0 : index
    %14 = vector.load %arg5[%c0_8, %c0_9] : memref<256x256xbf16, #tpu.memory_space<vmem>>, vector<256x256xbf16>
    %cst_10 = arith.constant dense<0.000000e+00> : vector<8x256xf32>
    %15 = tpu.matmul %13, %14, %cst_10 {dimension_numbers = #tpu.dot_dimension_numbers<[1], [0], [0], [1], [0, 0, 1, 1], [], []>} : vector<8x256xbf16>, vector<256x256xbf16>, vector<8x256xf32> -> vector<8x256xf32>
    %c0_11 = arith.constant 0 : index
    %c0_12 = arith.constant 0 : index
    %16 = vector.load %arg6[%c0_11, %c0_12] : memref<1x256xf32, #tpu.memory_space<vmem>>, vector<1x256xf32>
    %17 = vector.broadcast %16 : vector<1x256xf32> to vector<8x256xf32>
    %18 = arith.mulf %15, %17 : vector<8x256xf32>
    %c0_13 = arith.constant 0 : index
    %c0_14 = arith.constant 0 : index
    %19 = vector.load %arg7[%c0_13, %c0_14] : memref<1x256xf32, #tpu.memory_space<vmem>>, vector<1x256xf32>
    %20 = vector.broadcast %19 : vector<1x256xf32> to vector<8x256xf32>
    %21 = arith.addf %18, %20 : vector<8x256xf32>
    %cst_15 = arith.constant 2.000000e-01 : f32
    %22 = vector.broadcast %cst_15 : f32 to vector<8x256xf32>
    %23 = arith.mulf %22, %21 : vector<8x256xf32>
    %24 = arith.maximumf %21, %23 : vector<8x256xf32>
    %25 = arith.truncf %24 : vector<8x256xf32> to vector<8x256xbf16>
    %c0_16 = arith.constant 0 : index
    %c0_17 = arith.constant 0 : index
    %26 = vector.load %arg8[%c0_16, %c0_17] : memref<256x256xbf16, #tpu.memory_space<vmem>>, vector<256x256xbf16>
    %cst_18 = arith.constant dense<0.000000e+00> : vector<8x256xf32>
    %27 = tpu.matmul %25, %26, %cst_18 {dimension_numbers = #tpu.dot_dimension_numbers<[1], [0], [0], [1], [0, 0, 1, 1], [], []>} : vector<8x256xbf16>, vector<256x256xbf16>, vector<8x256xf32> -> vector<8x256xf32>
    %c0_19 = arith.constant 0 : index
    %c0_20 = arith.constant 0 : index
    %28 = vector.load %arg9[%c0_19, %c0_20] : memref<1x256xf32, #tpu.memory_space<vmem>>, vector<1x256xf32>
    %29 = vector.broadcast %28 : vector<1x256xf32> to vector<8x256xf32>
    %30 = arith.mulf %27, %29 : vector<8x256xf32>
    %c0_21 = arith.constant 0 : index
    %c0_22 = arith.constant 0 : index
    %31 = vector.load %arg10[%c0_21, %c0_22] : memref<1x256xf32, #tpu.memory_space<vmem>>, vector<1x256xf32>
    %32 = vector.broadcast %31 : vector<1x256xf32> to vector<8x256xf32>
    %33 = arith.addf %30, %32 : vector<8x256xf32>
    %cst_23 = arith.constant 2.000000e-01 : f32
    %34 = vector.broadcast %cst_23 : f32 to vector<8x256xf32>
    %35 = arith.mulf %34, %33 : vector<8x256xf32>
    %36 = arith.maximumf %33, %35 : vector<8x256xf32>
    %37 = arith.truncf %36 : vector<8x256xf32> to vector<8x256xbf16>
    %c0_24 = arith.constant 0 : index
    %c0_25 = arith.constant 0 : index
    %38 = vector.load %arg11[%c0_24, %c0_25] : memref<256x256xbf16, #tpu.memory_space<vmem>>, vector<256x256xbf16>
    %cst_26 = arith.constant dense<0.000000e+00> : vector<8x256xf32>
    %39 = tpu.matmul %37, %38, %cst_26 {dimension_numbers = #tpu.dot_dimension_numbers<[1], [0], [0], [1], [0, 0, 1, 1], [], []>} : vector<8x256xbf16>, vector<256x256xbf16>, vector<8x256xf32> -> vector<8x256xf32>
    %c0_27 = arith.constant 0 : index
    %c0_28 = arith.constant 0 : index
    %40 = vector.load %arg12[%c0_27, %c0_28] : memref<1x256xf32, #tpu.memory_space<vmem>>, vector<1x256xf32>
    %41 = vector.broadcast %40 : vector<1x256xf32> to vector<8x256xf32>
    %42 = arith.mulf %39, %41 : vector<8x256xf32>
    %c0_29 = arith.constant 0 : index
    %c0_30 = arith.constant 0 : index
    %43 = vector.load %arg13[%c0_29, %c0_30] : memref<1x256xf32, #tpu.memory_space<vmem>>, vector<1x256xf32>
    %44 = vector.broadcast %43 : vector<1x256xf32> to vector<8x256xf32>
    %45 = arith.addf %42, %44 : vector<8x256xf32>
    %cst_31 = arith.constant 2.000000e-01 : f32
    %46 = vector.broadcast %cst_31 : f32 to vector<8x256xf32>
    %47 = arith.mulf %46, %45 : vector<8x256xf32>
    %48 = arith.maximumf %45, %47 : vector<8x256xf32>
    %49 = arith.truncf %48 : vector<8x256xf32> to vector<8x256xbf16>
    %c0_32 = arith.constant 0 : index
    %c0_33 = arith.constant 0 : index
    %50 = vector.load %arg14[%c0_32, %c0_33] : memref<256x128xbf16, #tpu.memory_space<vmem>>, vector<256x128xbf16>
    %cst_34 = arith.constant dense<0.000000e+00> : vector<8x128xf32>
    %51 = tpu.matmul %49, %50, %cst_34 {dimension_numbers = #tpu.dot_dimension_numbers<[1], [0], [0], [1], [0, 0, 1, 1], [], []>} : vector<8x256xbf16>, vector<256x128xbf16>, vector<8x128xf32> -> vector<8x128xf32>
    %c0_35 = arith.constant 0 : index
    %c0_36 = arith.constant 0 : index
    %52 = vector.load %arg15[%c0_35, %c0_36] : memref<1x128xf32, #tpu.memory_space<vmem>>, vector<1x128xf32>
    %53 = vector.broadcast %52 : vector<1x128xf32> to vector<8x128xf32>
    %54 = arith.addf %51, %53 : vector<8x128xf32>
    %c0_37 = arith.constant 0 : index
    %c0_38 = arith.constant 0 : index
    %55 = vector.load %arg16[%c0_37, %c0_38] : memref<8x128xf32, #tpu.memory_space<vmem>>, vector<8x128xf32>
    tpu.vector_store %arg16[%c0_37, %c0_38], %54 {strides = array<i32>} : memref<8x128xf32, #tpu.memory_space<vmem>>, vector<8x128xf32>,
    return
  }
  func.func @transform_0(%arg0: i32) -> (i32, i32) {
    %c0_i32 = arith.constant 0 : i32
    %c0_i32_0 = arith.constant 0 : i32
    return %arg0, %c0_i32 : i32, i32
  }
  func.func @transform_1(%arg0: i32) -> (i32, i32) {
    %c0_i32 = arith.constant 0 : i32
    %c0_i32_0 = arith.constant 0 : i32
    %c0_i32_1 = arith.constant 0 : i32
    return %c0_i32, %c0_i32_0 : i32, i32
  }
  func.func @transform_2(%arg0: i32) -> (i32, i32) {
    %c0_i32 = arith.constant 0 : i32
    %c0_i32_0 = arith.constant 0 : i32
    %c0_i32_1 = arith.constant 0 : i32
    return %c0_i32, %c0_i32_0 : i32, i32
  }
  func.func @transform_3(%arg0: i32) -> (i32, i32) {
    %c0_i32 = arith.constant 0 : i32
    %c0_i32_0 = arith.constant 0 : i32
    %c0_i32_1 = arith.constant 0 : i32
    return %c0_i32, %c0_i32_0 : i32, i32
  }
  func.func @transform_4(%arg0: i32) -> (i32, i32) {
    %c0_i32 = arith.constant 0 : i32
    %c0_i32_0 = arith.constant 0 : i32
    %c0_i32_1 = arith.constant 0 : i32
    return %c0_i32, %c0_i32_0 : i32, i32
  }
  func.func @transform_5(%arg0: i32) -> (i32, i32) {
    %c0_i32 = arith.constant 0 : i32
    %c0_i32_0 = arith.constant 0 : i32
    %c0_i32_1 = arith.constant 0 : i32
    return %c0_i32, %c0_i32_0 : i32, i32
  }
  func.func @transform_6(%arg0: i32) -> (i32, i32) {
    %c0_i32 = arith.constant 0 : i32
    %c0_i32_0 = arith.constant 0 : i32
    %c0_i32_1 = arith.constant 0 : i32
    return %c0_i32, %c0_i32_0 : i32, i32
  }
  func.func @transform_7(%arg0: i32) -> (i32, i32) {
    %c0_i32 = arith.constant 0 : i32
    %c0_i32_0 = arith.constant 0 : i32
    %c0_i32_1 = arith.constant 0 : i32
    return %c0_i32, %c0_i32_0 : i32, i32
  }
  func.func @transform_8(%arg0: i32) -> (i32, i32) {
    %c0_i32 = arith.constant 0 : i32
    %c0_i32_0 = arith.constant 0 : i32
    %c0_i32_1 = arith.constant 0 : i32
    return %c0_i32, %c0_i32_0 : i32, i32
  }
  func.func @transform_9(%arg0: i32) -> (i32, i32) {
    %c0_i32 = arith.constant 0 : i32
    %c0_i32_0 = arith.constant 0 : i32
    %c0_i32_1 = arith.constant 0 : i32
    return %c0_i32, %c0_i32_0 : i32, i32
  }
  func.func @transform_10(%arg0: i32) -> (i32, i32) {
    %c0_i32 = arith.constant 0 : i32
    %c0_i32_0 = arith.constant 0 : i32
    %c0_i32_1 = arith.constant 0 : i32
    return %c0_i32, %c0_i32_0 : i32, i32
  }
  func.func @transform_11(%arg0: i32) -> (i32, i32) {
    %c0_i32 = arith.constant 0 : i32
    %c0_i32_0 = arith.constant 0 : i32
    %c0_i32_1 = arith.constant 0 : i32
    return %c0_i32, %c0_i32_0 : i32, i32
  }
  func.func @transform_12(%arg0: i32) -> (i32, i32) {
    %c0_i32 = arith.constant 0 : i32
    %c0_i32_0 = arith.constant 0 : i32
    %c0_i32_1 = arith.constant 0 : i32
    return %c0_i32, %c0_i32_0 : i32, i32
  }
  func.func @transform_13(%arg0: i32) -> (i32, i32) {
    %c0_i32 = arith.constant 0 : i32
    %c0_i32_0 = arith.constant 0 : i32
    %c0_i32_1 = arith.constant 0 : i32
    return %c0_i32, %c0_i32_0 : i32, i32
  }
  func.func @transform_14(%arg0: i32) -> (i32, i32) {
    %c0_i32 = arith.constant 0 : i32
    %c0_i32_0 = arith.constant 0 : i32
    %c0_i32_1 = arith.constant 0 : i32
    return %c0_i32, %c0_i32_0 : i32, i32
  }
  func.func @transform_15(%arg0: i32) -> (i32, i32) {
    %c0_i32 = arith.constant 0 : i32
    %c0_i32_0 = arith.constant 0 : i32
    return %arg0, %c0_i32 : i32, i32
  }
}

</mosaic_0001>

<llo_original>
// kernel: smirk_emo_forward.1
$region0: #{smirk_emo_forward.1}
  #allocation0 [shape = 'u32[]', space=smem, size = 0x4, offset = 0x4, fixed_abs, tag = 'smem constant byte address 0x4 - core index']
  #allocation1 [shape = 'u32[144,128]{1,0:T(1,128)}', space=vmem, size = 0x12000, scoped, tag = 'internal scratch']
  %s0 = inlined_call_operand.vmem [shape: f32[16,384], index: 0, kind: input, shape index: {}]
  %s1 = inlined_call_operand.hbm [shape: bf16[384,256], index: 1, kind: input, shape index: {}]
  %s2 = inlined_call_operand.vmem [shape: f32[1,256], index: 2, kind: input, shape index: {}]
  %s3 = inlined_call_operand.vmem [shape: f32[1,256], index: 3, kind: input, shape index: {}]
  %s4 = inlined_call_operand.hbm [shape: bf16[256,256], index: 4, kind: input, shape index: {}]
  %s5 = inlined_call_operand.vmem [shape: f32[1,256], index: 5, kind: input, shape index: {}]
  %s6 = inlined_call_operand.vmem [shape: f32[1,256], index: 6, kind: input, shape index: {}]
  %s7 = inlined_call_operand.hbm [shape: bf16[256,256], index: 7, kind: input, shape index: {}]
  %s8 = inlined_call_operand.vmem [shape: f32[1,256], index: 8, kind: input, shape index: {}]
  %s9 = inlined_call_operand.vmem [shape: f32[1,256], index: 9, kind: input, shape index: {}]
  %s10 = inlined_call_operand.hbm [shape: bf16[256,256], index: 10, kind: input, shape index: {}]
  %s11 = inlined_call_operand.vmem [shape: f32[1,256], index: 11, kind: input, shape index: {}]
  %s12 = inlined_call_operand.vmem [shape: f32[1,256], index: 12, kind: input, shape index: {}]
  %s13 = inlined_call_operand.vmem [shape: bf16[256,128], index: 13, kind: input, shape index: {}]
  %s14 = inlined_call_operand.vmem [shape: f32[1,128], index: 14, kind: input, shape index: {}]
  %s15 = inlined_call_operand.vmem [shape: f32[16,128], index: 15, kind: output, shape index: {}]
  %s16 = sld [smem:[#allocation0]]
  $region109: #{smirk_emo_forward.1} parent=0
    _
  %s18 = ssub.s32 1, %s16
  %s19 = scalar_select 0, %s18, %s16
  $region1: #{smirk_emo_forward.1} parent=0
    #allocation2 [shape = 'u8[196608]{0}', space=vmem, size = 0x30000, scoped, tag = 'input window, operand 1, single buffered']
    #allocation3 [shape = 's32[2]{0}', space=sflag, size = 0x8, scoped, tag = 'scoped memory for smirk_emo_forward.1']
    #allocation4 [shape = 'u8[131072]{0}', space=vmem, size = 0x20000, scoped, tag = 'input window, operand 4, single buffered']
    #allocation5 [shape = 's32[1]{0}', space=sflag, size = 0x4, scoped, tag = 'scoped memory for smirk_emo_forward.1']
    #allocation6 [shape = 'u8[131072]{0}', space=vmem, size = 0x20000, scoped, tag = 'input window, operand 7, single buffered']
    #allocation7 [shape = 'u8[131072]{0}', space=vmem, size = 0x20000, scoped, tag = 'input window, operand 10, single buffered']
    #allocation8 [shape = 's32[1]{0}', space=sflag, size = 0x4, scoped, tag = 'scoped memory for smirk_emo_forward.1']
    %20 = vsyncpa [#allocation3], 0
    %21 = vsyncpa [#allocation5], 0
    %22 = vsyncpa [#allocation8], 0
    loop: start=0, step=1, limit=4
    $region2: #{smirk_emo_forward.1} parent=1 // loop_pre_header
      _
    $region3: #{smirk_emo_forward.1} parent=1 // loop_header
      %s24 = sphi 0, %s28
      %p25 = scmp.ge.s32.totalorder %s24, 4
      %s34 = sphi 0, %s36
      %s37 = sphi 0, %s34
      %s38 = sphi 0, %s37
      %s54 = sphi 0, %s38
      %s58 = sphi 0, %s58
      %s60 = sphi 0, %s58
      %s61 = sphi 0, %s60
      %s75 = sphi 0, %s61
      %s79 = sphi 0, %s79
      %s81 = sphi 0, %s79
      %s82 = sphi 0, %s81
      %s96 = sphi 0, %s82
      %s100 = sphi 0, %s100
      %s102 = sphi 0, %s100
      %s103 = sphi 0, %s102
      %s117 = sphi 0, %s103
      %s121 = sphi 0, %s121
      %s123 = sphi 0, %s121
      %s124 = sphi 0, %s123
      %s138 = sphi 0, %s124
      %s142 = sphi 0, %s142
      %s144 = sphi 0, %s142
      %s145 = sphi 0, %s144
      %s159 = sphi 0, %s145
      %s163 = sphi 0, %s163
      %s165 = sphi 0, %s163
      %s166 = sphi 0, %s165
      %s180 = sphi 0, %s166
      %s184 = sphi 0, %s184
      %s186 = sphi 0, %s184
      %s187 = sphi 0, %s186
      %s201 = sphi 0, %s187
      %s205 = sphi 0, %s205
      %s207 = sphi 0, %s205
      %s208 = sphi 0, %s207
      %s222 = sphi 0, %s208
      %s226 = sphi 0, %s226
      %s228 = sphi 0, %s226
      %s229 = sphi 0, %s228
      %s243 = sphi 0, %s229
      %s247 = sphi 0, %s247
      %s249 = sphi 0, %s247
      %s250 = sphi 0, %s249
      %s264 = sphi 0, %s250
      %s268 = sphi 0, %s268
      %s270 = sphi 0, %s268
      %s271 = sphi 0, %s270
      %s285 = sphi 0, %s271
      %s289 = sphi 0, %s289
      %s291 = sphi 0, %s289
      %s292 = sphi 0, %s291
      %s306 = sphi 0, %s292
      %s310 = sphi 0, %s310
      %s312 = sphi 0, %s310
      %s313 = sphi 0, %s312
      %s327 = sphi 0, %s313
      %s331 = sphi 0, %s331
      %s333 = sphi 0, %s331
      %s334 = sphi 0, %s333
      %s348 = sphi 0, %s334
      %s354 = sphi 0, %s356
      %s357 = sphi 0, %s354
      %s358 = sphi 0, %s357
      %s374 = sphi 0, %s358
    $region4: #{smirk_emo_forward.1} parent=1 // loop_header_branch
      %27 = sbr.rel (%p25) target = $region8
    $region5: #{smirk_emo_forward.1} parent=1 // loop_body
      %s29 = ssub.s32 %s24, 1
      %s30 = ssub.s32 %s24, 2
      %s31 = sadd.s32 %s24, 1
      %s32 = ssub.s32 %s24, %s31
      %p33 = scmp.eq.s32.totalorder %s32, 0
      %s35 = sadd.s32 %s34, 1
      %s36 = scalar_select %p33, %s34, %s35
      %p39 = pneg %p33
      %p40 = scmp.eq.s32.totalorder %s24, 1
      %p41 = por %p39, %p40
      %p42 = scmp.ne.s32.totalorder %s34, %s37
      %p43 = scmp.eq.s32.totalorder %s24, 0
      %p44 = por %p42, %p43
      %p45 = scmp.ne.s32.totalorder %s34, %s37
      %p46 = scmp.eq.s32.totalorder %s29, 1
      %p47 = por %p45, %p46
      %p48 = scmp.ne.s32.totalorder %s37, %s38
      %p49 = scmp.eq.s32.totalorder %s29, 0
      %p50 = por %p48, %p49
      %p51 = scmp.ne.s32.totalorder %s37, %s38
      %p52 = scmp.eq.s32.totalorder %s30, 1
      %p53 = por %p51, %p52
      %p55 = scmp.ne.s32.totalorder %s38, %s54
      %p56 = scmp.eq.s32.totalorder %s30, 0
      %p57 = por %p55, %p56
      %s59 = sadd.s32 %s58, 1
      %p62 = scmp.eq.s32.totalorder %s24, 1
      %p63 = scmp.ne.s32.totalorder %s58, %s60
      %p64 = scmp.eq.s32.totalorder %s24, 0
      %p65 = por %p63, %p64
      %p66 = scmp.ne.s32.totalorder %s58, %s60
      %p67 = scmp.eq.s32.totalorder %s29, 1
      %p68 = por %p66, %p67
      %p69 = scmp.ne.s32.totalorder %s60, %s61
      %p70 = scmp.eq.s32.totalorder %s29, 0
      %p71 = por %p69, %p70
      %p72 = scmp.ne.s32.totalorder %s60, %s61
      %p73 = scmp.eq.s32.totalorder %s30, 1
      %p74 = por %p72, %p73
      %p76 = scmp.ne.s32.totalorder %s61, %s75
      %p77 = scmp.eq.s32.totalorder %s30, 0
      %p78 = por %p76, %p77
      %s80 = sadd.s32 %s79, 1
      %p83 = scmp.eq.s32.totalorder %s24, 1
      %p84 = scmp.ne.s32.totalorder %s79, %s81
      %p85 = scmp.eq.s32.totalorder %s24, 0
      %p86 = por %p84, %p85
      %p87 = scmp.ne.s32.totalorder %s79, %s81
      %p88 = scmp.eq.s32.totalorder %s29, 1
      %p89 = por %p87, %p88
      %p90 = scmp.ne.s32.totalorder %s81, %s82
      %p91 = scmp.eq.s32.totalorder %s29, 0
      %p92 = por %p90, %p91
      %p93 = scmp.ne.s32.totalorder %s81, %s82
      %p94 = scmp.eq.s32.totalorder %s30, 1
      %p95 = por %p93, %p94
      %p97 = scmp.ne.s32.totalorder %s82, %s96
      %p98 = scmp.eq.s32.totalorder %s30, 0
      %p99 = por %p97, %p98
      %s101 = sadd.s32 %s100, 1
      %p104 = scmp.eq.s32.totalorder %s24, 1
      %p105 = scmp.ne.s32.totalorder %s100, %s102
      %p106 = scmp.eq.s32.totalorder %s24, 0
      %p107 = por %p105, %p106
      %p108 = scmp.ne.s32.totalorder %s100, %s102
      %p109 = scmp.eq.s32.totalorder %s29, 1
      %p110 = por %p108, %p109
      %p111 = scmp.ne.s32.totalorder %s102, %s103
      %p112 = scmp.eq.s32.totalorder %s29, 0
      %p113 = por %p111, %p112
      %p114 = scmp.ne.s32.totalorder %s102, %s103
      %p115 = scmp.eq.s32.totalorder %s30, 1
      %p116 = por %p114, %p115
      %p118 = scmp.ne.s32.totalorder %s103, %s117
      %p119 = scmp.eq.s32.totalorder %s30, 0
      %p120 = por %p118, %p119
      %s122 = sadd.s32 %s121, 1
      %p125 = scmp.eq.s32.totalorder %s24, 1
      %p126 = scmp.ne.s32.totalorder %s121, %s123
      %p127 = scmp.eq.s32.totalorder %s24, 0
      %p128 = por %p126, %p127
      %p129 = scmp.ne.s32.totalorder %s121, %s123
      %p130 = scmp.eq.s32.totalorder %s29, 1
      %p131 = por %p129, %p130
      %p132 = scmp.ne.s32.totalorder %s123, %s124
      %p133 = scmp.eq.s32.totalorder %s29, 0
      %p134 = por %p132, %p133
      %p135 = scmp.ne.s32.totalorder %s123, %s124
      %p136 = scmp.eq.s32.totalorder %s30, 1
      %p137 = por %p135, %p136
      %p139 = scmp.ne.s32.totalorder %s124, %s138
      %p140 = scmp.eq.s32.totalorder %s30, 0
      %p141 = por %p139, %p140
      %s143 = sadd.s32 %s142, 1
      %p146 = scmp.eq.s32.totalorder %s24, 1
      %p147 = scmp.ne.s32.totalorder %s142, %s144
      %p148 = scmp.eq.s32.totalorder %s24, 0
      %p149 = por %p147, %p148
      %p150 = scmp.ne.s32.totalorder %s142, %s144
      %p151 = scmp.eq.s32.totalorder %s29, 1
      %p152 = por %p150, %p151
      %p153 = scmp.ne.s32.totalorder %s144, %s145
      %p154 = scmp.eq.s32.totalorder %s29, 0
      %p155 = por %p153, %p154
      %p156 = scmp.ne.s32.totalorder %s144, %s145
      %p157 = scmp.eq.s32.totalorder %s30, 1
      %p158 = por %p156, %p157
      %p160 = scmp.ne.s32.totalorder %s145, %s159
      %p161 = scmp.eq.s32.totalorder %s30, 0
      %p162 = por %p160, %p161
      %s164 = sadd.s32 %s163, 1
      %p167 = scmp.eq.s32.totalorder %s24, 1
      %p168 = scmp.ne.s32.totalorder %s163, %s165
      %p169 = scmp.eq.s32.totalorder %s24, 0
      %p170 = por %p168, %p169
      %p171 = scmp.ne.s32.totalorder %s163, %s165
      %p172 = scmp.eq.s32.totalorder %s29, 1
      %p173 = por %p171, %p172
      %p174 = scmp.ne.s32.totalorder %s165, %s166
      %p175 = scmp.eq.s32.totalorder %s29, 0
      %p176 = por %p174, %p175
      %p177 = scmp.ne.s32.totalorder %s165, %s166
      %p178 = scmp.eq.s32.totalorder %s30, 1
      %p179 = por %p177, %p178
      %p181 = scmp.ne.s32.totalorder %s166, %s180
      %p182 = scmp.eq.s32.totalorder %s30, 0
      %p183 = por %p181, %p182
      %s185 = sadd.s32 %s184, 1
      %p188 = scmp.eq.s32.totalorder %s24, 1
      %p189 = scmp.ne.s32.totalorder %s184, %s186
      %p190 = scmp.eq.s32.totalorder %s24, 0
      %p191 = por %p189, %p190
      %p192 = scmp.ne.s32.totalorder %s184, %s186
      %p193 = scmp.eq.s32.totalorder %s29, 1
      %p194 = por %p192, %p193
      %p195 = scmp.ne.s32.totalorder %s186, %s187
      %p196 = scmp.eq.s32.totalorder %s29, 0
      %p197 = por %p195, %p196
      %p198 = scmp.ne.s32.totalorder %s186, %s187
      %p199 = scmp.eq.s32.totalorder %s30, 1
      %p200 = por %p198, %p199
      %p202 = scmp.ne.s32.totalorder %s187, %s201
      %p203 = scmp.eq.s32.totalorder %s30, 0
      %p204 = por %p202, %p203
      %s206 = sadd.s32 %s205, 1
      %p209 = scmp.eq.s32.totalorder %s24, 1
      %p210 = scmp.ne.s32.totalorder %s205, %s207
      %p211 = scmp.eq.s32.totalorder %s24, 0
      %p212 = por %p210, %p211
      %p213 = scmp.ne.s32.totalorder %s205, %s207
      %p214 = scmp.eq.s32.totalorder %s29, 1
      %p215 = por %p213, %p214
      %p216 = scmp.ne.s32.totalorder %s207, %s208
      %p217 = scmp.eq.s32.totalorder %s29, 0
      %p218 = por %p216, %p217
      %p219 = scmp.ne.s32.totalorder %s207, %s208
      %p220 = scmp.eq.s32.totalorder %s30, 1
      %p221 = por %p219, %p220
      %p223 = scmp.ne.s32.totalorder %s208, %s222
      %p224 = scmp.eq.s32.totalorder %s30, 0
      %p225 = por %p223, %p224
      %s227 = sadd.s32 %s226, 1
      %p230 = scmp.eq.s32.totalorder %s24, 1
      %p231 = scmp.ne.s32.totalorder %s226, %s228
      %p232 = scmp.eq.s32.totalorder %s24, 0
      %p233 = por %p231, %p232
      %p234 = scmp.ne.s32.totalorder %s226, %s228
      %p235 = scmp.eq.s32.totalorder %s29, 1
      %p236 = por %p234, %p235
      %p237 = scmp.ne.s32.totalorder %s228, %s229
      %p238 = scmp.eq.s32.totalorder %s29, 0
      %p239 = por %p237, %p238
      %p240 = scmp.ne.s32.totalorder %s228, %s229
      %p241 = scmp.eq.s32.totalorder %s30, 1
      %p242 = por %p240, %p241
      %p244 = scmp.ne.s32.totalorder %s229, %s243
      %p245 = scmp.eq.s32.totalorder %s30, 0
      %p246 = por %p244, %p245
      %s248 = sadd.s32 %s247, 1
      %p251 = scmp.eq.s32.totalorder %s24, 1
      %p252 = scmp.ne.s32.totalorder %s247, %s249
      %p253 = scmp.eq.s32.totalorder %s24, 0
      %p254 = por %p252, %p253
      %p255 = scmp.ne.s32.totalorder %s247, %s249
      %p256 = scmp.eq.s32.totalorder %s29, 1
      %p257 = por %p255, %p256
      %p258 = scmp.ne.s32.totalorder %s249, %s250
      %p259 = scmp.eq.s32.totalorder %s29, 0
      %p260 = por %p258, %p259
      %p261 = scmp.ne.s32.totalorder %s249, %s250
      %p262 = scmp.eq.s32.totalorder %s30, 1
      %p263 = por %p261, %p262
      %p265 = scmp.ne.s32.totalorder %s250, %s264
      %p266 = scmp.eq.s32.totalorder %s30, 0
      %p267 = por %p265, %p266
      %s269 = sadd.s32 %s268, 1
      %p272 = scmp.eq.s32.totalorder %s24, 1
      %p273 = scmp.ne.s32.totalorder %s268, %s270
      %p274 = scmp.eq.s32.totalorder %s24, 0
      %p275 = por %p273, %p274
      %p276 = scmp.ne.s32.totalorder %s268, %s270
      %p277 = scmp.eq.s32.totalorder %s29, 1
      %p278 = por %p276, %p277
      %p279 = scmp.ne.s32.totalorder %s270, %s271
      %p280 = scmp.eq.s32.totalorder %s29, 0
      %p281 = por %p279, %p280
      %p282 = scmp.ne.s32.totalorder %s270, %s271
      %p283 = scmp.eq.s32.totalorder %s30, 1
      %p284 = por %p282, %p283
      %p286 = scmp.ne.s32.totalorder %s271, %s285
      %p287 = scmp.eq.s32.totalorder %s30, 0
      %p288 = por %p286, %p287
      %s290 = sadd.s32 %s289, 1
      %p293 = scmp.eq.s32.totalorder %s24, 1
      %p294 = scmp.ne.s32.totalorder %s289, %s291
      %p295 = scmp.eq.s32.totalorder %s24, 0
      %p296 = por %p294, %p295
      %p297 = scmp.ne.s32.totalorder %s289, %s291
      %p298 = scmp.eq.s32.totalorder %s29, 1
      %p299 = por %p297, %p298
      %p300 = scmp.ne.s32.totalorder %s291, %s292
      %p301 = scmp.eq.s32.totalorder %s29, 0
      %p302 = por %p300, %p301
      %p303 = scmp.ne.s32.totalorder %s291, %s292
      %p304 = scmp.eq.s32.totalorder %s30, 1
      %p305 = por %p303, %p304
      %p307 = scmp.ne.s32.totalorder %s292, %s306
      %p308 = scmp.eq.s32.totalorder %s30, 0
      %p309 = por %p307, %p308
      %s311 = sadd.s32 %s310, 1
      %p314 = scmp.eq.s32.totalorder %s24, 1
      %p315 = scmp.ne.s32.totalorder %s310, %s312
      %p316 = scmp.eq.s32.totalorder %s24, 0
      %p317 = por %p315, %p316
      %p318 = scmp.ne.s32.totalorder %s310, %s312
      %p319 = scmp.eq.s32.totalorder %s29, 1
      %p320 = por %p318, %p319
      %p321 = scmp.ne.s32.totalorder %s312, %s313
      %p322 = scmp.eq.s32.totalorder %s29, 0
      %p323 = por %p321, %p322
      %p324 = scmp.ne.s32.totalorder %s312, %s313
      %p325 = scmp.eq.s32.totalorder %s30, 1
      %p326 = por %p324, %p325
      %p328 = scmp.ne.s32.totalorder %s313, %s327
      %p329 = scmp.eq.s32.totalorder %s30, 0
      %p330 = por %p328, %p329
      %s332 = sadd.s32 %s331, 1
      %p335 = scmp.eq.s32.totalorder %s24, 1
      %p336 = scmp.ne.s32.totalorder %s331, %s333
      %p337 = scmp.eq.s32.totalorder %s24, 0
      %p338 = por %p336, %p337
      %p339 = scmp.ne.s32.totalorder %s331, %s333
      %p340 = scmp.eq.s32.totalorder %s29, 1
      %p341 = por %p339, %p340
      %p342 = scmp.ne.s32.totalorder %s333, %s334
      %p343 = scmp.eq.s32.totalorder %s29, 0
      %p344 = por %p342, %p343
      %p345 = scmp.ne.s32.totalorder %s333, %s334
      %p346 = scmp.eq.s32.totalorder %s30, 1
      %p347 = por %p345, %p346
      %p349 = scmp.ne.s32.totalorder %s334, %s348
      %p350 = scmp.eq.s32.totalorder %s30, 0
      %p351 = por %p349, %p350
      %s352 = ssub.s32 %s24, %s31
      %p353 = scmp.eq.s32.totalorder %s352, 0
      %s355 = sadd.s32 %s354, 1
      %s356 = scalar_select %p353, %s354, %s355
      %p359 = pneg %p353
      %p360 = scmp.eq.s32.totalorder %s24, 1
      %p361 = por %p359, %p360
      %p362 = scmp.ne.s32.totalorder %s354, %s357
      %p363 = scmp.eq.s32.totalorder %s24, 0
      %p364 = por %p362, %p363
      %p365 = scmp.ne.s32.totalorder %s354, %s357
      %p366 = scmp.eq.s32.totalorder %s29, 1
      %p367 = por %p365, %p366
      %p368 = scmp.ne.s32.totalorder %s357, %s358
      %p369 = scmp.eq.s32.totalorder %s29, 0
      %p370 = por %p368, %p369
      %p371 = scmp.ne.s32.totalorder %s357, %s358
      %p372 = scmp.eq.s32.totalorder %s30, 1
      %p373 = por %p371, %p372
      %p375 = scmp.ne.s32.totalorder %s358, %s374
      %p376 = scmp.eq.s32.totalorder %s30, 0
      %p377 = por %p375, %p376
      %p378 = scmp.le.s32.totalorder 1, %s24
      %p379 = scmp.lt.s32.totalorder %s24, 3
      %p380 = pnand %p378, %p379
      %p381 = pneg %p380
      // Predicated region
      $region9: #{smirk_emo_forward.1} parent=5 // pred_check
        _
      $region10: #{smirk_emo_forward.1} parent=5 // pred_check_branch
        %383 = sbr.rel (%p380) target = $region12
      $region11: #{smirk_emo_forward.1} parent=5 // pred_region
        %s384 = ssub.s32 %s24, 1
        // Predicated region
        $region13: #{smirk_emo_forward.1} parent=11 // pred_check
          %p385 = pneg %p71
        $region14: #{smirk_emo_forward.1} parent=11 // pred_check_branch
          %387 = sbr.rel (%p385) target = $region16
        $region15: #{smirk_emo_forward.1} parent=11 // pred_region
          %s389 = ssub.s32 6144, 6144
          %390 = vsyncadd [#allocation3], %s389
          %s391 = sshll.u32 [#allocation2], 4
          %s392 = int_to_ptr.vmem [resolvable:$true] %s391
          %397 = dma.hbm_to_vmem [thread:$0]  %s1, 6144, %s392, [#allocation3], 128, 128, 8
        $region16: #{smirk_emo_forward.1} parent=11 // pred_fallthru
          _
        // Predicated region
        $region17: #{smirk_emo_forward.1} parent=11 // pred_check
          %p398 = pneg %p92
        $region18: #{smirk_emo_forward.1} parent=11 // pred_check_branch
          %400 = sbr.rel (%p398) target = $region20
        $region19: #{smirk_emo_forward.1} parent=11 // pred_region
          _
        $region20: #{smirk_emo_forward.1} parent=11 // pred_fallthru
          _
        // Predicated region
        $region21: #{smirk_emo_forward.1} parent=11 // pred_check
          %p401 = pneg %p113
        $region22: #{smirk_emo_forward.1} parent=11 // pred_check_branch
          %403 = sbr.rel (%p401) target = $region24
        $region23: #{smirk_emo_forward.1} parent=11 // pred_region
          _
        $region24: #{smirk_emo_forward.1} parent=11 // pred_fallthru
          _
        // Predicated region
        $region25: #{smirk_emo_forward.1} parent=11 // pred_check
          %p404 = pneg %p134
        $region26: #{smirk_emo_forward.1} parent=11 // pred_check_branch
          %406 = sbr.rel (%p404) target = $region28
        $region27: #{smirk_emo_forward.1} parent=11 // pred_region
          %s408 = ssub.s32 4096, 4096
          %409 = vsyncadd [#allocation5], %s408
          %s410 = sshll.u32 [#allocation4], 4
          %s411 = int_to_ptr.vmem [resolvable:$true] %s410
          %416 = dma.hbm_to_vmem [thread:$0]  %s4, 4096, %s411, [#allocation5], 128, 128, 8
        $region28: #{smirk_emo_forward.1} parent=11 // pred_fallthru
          _
        // Predicated region
        $region29: #{smirk_emo_forward.1} parent=11 // pred_check
          %p417 = pneg %p155
        $region30: #{smirk_emo_forward.1} parent=11 // pred_check_branch
          %419 = sbr.rel (%p417) target = $region32
        $region31: #{smirk_emo_forward.1} parent=11 // pred_region
          _
        $region32: #{smirk_emo_forward.1} parent=11 // pred_fallthru
          _
        // Predicated region
        $region33: #{smirk_emo_forward.1} parent=11 // pred_check
          %p420 = pneg %p176
        $region34: #{smirk_emo_forward.1} parent=11 // pred_check_branch
          %422 = sbr.rel (%p420) target = $region36
        $region35: #{smirk_emo_forward.1} parent=11 // pred_region
          _
        $region36: #{smirk_emo_forward.1} parent=11 // pred_fallthru
          _
        // Predicated region
        $region37: #{smirk_emo_forward.1} parent=11 // pred_check
          %p423 = pneg %p197
        $region38: #{smirk_emo_forward.1} parent=11 // pred_check_branch
          %425 = sbr.rel (%p423) target = $region40
        $region39: #{smirk_emo_forward.1} parent=11 // pred_region
          %s427 = ssub.s32 4096, 4096
          %428 = vsyncadd [#allocation5], %s427
          %s429 = sshll.u32 [#allocation6], 4
          %s430 = int_to_ptr.vmem [resolvable:$true] %s429
          %435 = dma.hbm_to_vmem [thread:$0]  %s7, 4096, %s430, [#allocation5], 128, 128, 8
        $region40: #{smirk_emo_forward.1} parent=11 // pred_fallthru
          _
        // Predicated region
        $region41: #{smirk_emo_forward.1} parent=11 // pred_check
          %p436 = pneg %p218
        $region42: #{smirk_emo_forward.1} parent=11 // pred_check_branch
          %438 = sbr.rel (%p436) target = $region44
        $region43: #{smirk_emo_forward.1} parent=11 // pred_region
          _
        $region44: #{smirk_emo_forward.1} parent=11 // pred_fallthru
          _
        // Predicated region
        $region45: #{smirk_emo_forward.1} parent=11 // pred_check
          %p439 = pneg %p239
        $region46: #{smirk_emo_forward.1} parent=11 // pred_check_branch
          %441 = sbr.rel (%p439) target = $region48
        $region47: #{smirk_emo_forward.1} parent=11 // pred_region
          _
        $region48: #{smirk_emo_forward.1} parent=11 // pred_fallthru
          _
        // Predicated region
        $region49: #{smirk_emo_forward.1} parent=11 // pred_check
          %p442 = pneg %p260
        $region50: #{smirk_emo_forward.1} parent=11 // pred_check_branch
          %444 = sbr.rel (%p442) target = $region52
        $region51: #{smirk_emo_forward.1} parent=11 // pred_region
          %s446 = ssub.s32 4096, 4096
          %447 = vsyncadd [#allocation8], %s446
          %s448 = sshll.u32 [#allocation7], 4
          %s449 = int_to_ptr.vmem [resolvable:$true] %s448
          %454 = dma.hbm_to_vmem [thread:$0]  %s10, 4096, %s449, [#allocation8], 128, 128, 8
        $region52: #{smirk_emo_forward.1} parent=11 // pred_fallthru
          _
        // Predicated region
        $region53: #{smirk_emo_forward.1} parent=11 // pred_check
          %p455 = pneg %p281
        $region54: #{smirk_emo_forward.1} parent=11 // pred_check_branch
          %457 = sbr.rel (%p455) target = $region56
        $region55: #{smirk_emo_forward.1} parent=11 // pred_region
          _
        $region56: #{smirk_emo_forward.1} parent=11 // pred_fallthru
          _
        // Predicated region
        $region57: #{smirk_emo_forward.1} parent=11 // pred_check
          %p458 = pneg %p302
        $region58: #{smirk_emo_forward.1} parent=11 // pred_check_branch
          %460 = sbr.rel (%p458) target = $region60
        $region59: #{smirk_emo_forward.1} parent=11 // pred_region
          _
        $region60: #{smirk_emo_forward.1} parent=11 // pred_fallthru
          _
        // Predicated region
        $region61: #{smirk_emo_forward.1} parent=11 // pred_check
          %p461 = pneg %p323
        $region62: #{smirk_emo_forward.1} parent=11 // pred_check_branch
          %463 = sbr.rel (%p461) target = $region64
        $region63: #{smirk_emo_forward.1} parent=11 // pred_region
          _
        $region64: #{smirk_emo_forward.1} parent=11 // pred_fallthru
          _
        // Predicated region
        $region65: #{smirk_emo_forward.1} parent=11 // pred_check
          %p464 = pneg %p344
        $region66: #{smirk_emo_forward.1} parent=11 // pred_check_branch
          %466 = sbr.rel (%p464) target = $region68
        $region67: #{smirk_emo_forward.1} parent=11 // pred_region
          _
        $region68: #{smirk_emo_forward.1} parent=11 // pred_fallthru
          _
      $region12: #{smirk_emo_forward.1} parent=5 // pred_fallthru
        _
      %p467 = scmp.lt.s32.totalorder %s24, 2
      // Predicated region
      $region69: #{smirk_emo_forward.1} parent=5 // pred_check
        %p468 = pneg %p467
      $region70: #{smirk_emo_forward.1} parent=5 // pred_check_branch
        %470 = sbr.rel (%p468) target = $region72
      $region71: #{smirk_emo_forward.1} parent=5 // pred_region
        // Predicated region
        $region73: #{smirk_emo_forward.1} parent=71 // pred_check
          %p471 = pneg %p44
        $region74: #{smirk_emo_forward.1} parent=71 // pred_check_branch
          %473 = sbr.rel (%p471) target = $region76
        $region75: #{smirk_emo_forward.1} parent=71 // pred_region
          %p474 = scmp.lt.s32.totalorder %s24, 1
          %s475 = scalar_select %p474, %s24, 1
          %s476 = smul.addr %s475, 3
          %s477 = smul.addr %s476, 8
          %s478 = scalar_lea.vmem %s0, %s477
        $region76: #{smirk_emo_forward.1} parent=71 // pred_fallthru
          _
      $region72: #{smirk_emo_forward.1} parent=5 // pred_fallthru
        _
      %p479 = scmp.le.s32.totalorder 1, %s24
      %p480 = scmp.lt.s32.totalorder %s24, 3
      %p481 = pnand %p479, %p480
      %p482 = pneg %p481
      // Predicated region
      $region77: #{smirk_emo_forward.1} parent=5 // pred_check
        _
      $region78: #{smirk_emo_forward.1} parent=5 // pred_check_branch
        %484 = sbr.rel (%p481) target = $region80
      $region79: #{smirk_emo_forward.1} parent=5 // pred_region
        %s485 = ssub.s32 %s24, 1
        // Predicated region
        $region81: #{smirk_emo_forward.1} parent=79 // pred_check
          %p486 = pneg %p71
        $region82: #{smirk_emo_forward.1} parent=79 // pred_check_branch
          %488 = sbr.rel (%p486) target = $region84
        $region83: #{smirk_emo_forward.1} parent=79 // pred_region
          %489 = dma.done [#allocation3], 6144
        $region84: #{smirk_emo_forward.1} parent=79 // pred_fallthru
          _
        // Predicated region
        $region85: #{smirk_emo_forward.1} parent=79 // pred_check
          %p490 = pneg %p134
        $region86: #{smirk_emo_forward.1} parent=79 // pred_check_branch
          %492 = sbr.rel (%p490) target = $region88
        $region87: #{smirk_emo_forward.1} parent=79 // pred_region
          %493 = dma.done [#allocation5], 4096
        $region88: #{smirk_emo_forward.1} parent=79 // pred_fallthru
          _
        // Predicated region
        $region89: #{smirk_emo_forward.1} parent=79 // pred_check
          %p494 = pneg %p197
        $region90: #{smirk_emo_forward.1} parent=79 // pred_check_branch
          %496 = sbr.rel (%p494) target = $region92
        $region91: #{smirk_emo_forward.1} parent=79 // pred_region
          %497 = dma.done [#allocation5], 4096
        $region92: #{smirk_emo_forward.1} parent=79 // pred_fallthru
          _
        // Predicated region
        $region93: #{smirk_emo_forward.1} parent=79 // pred_check
          %p498 = pneg %p260
        $region94: #{smirk_emo_forward.1} parent=79 // pred_check_branch
          %500 = sbr.rel (%p498) target = $region96
        $region95: #{smirk_emo_forward.1} parent=79 // pred_region
          %501 = dma.done [#allocation8], 4096
        $region96: #{smirk_emo_forward.1} parent=79 // pred_fallthru
          _
        %p502 = scmp.lt.s32.totalorder %s29, 1
        %s503 = scalar_select %p502, %s29, 1
        %s504 = smul.addr %s503, 3
        %s505 = smul.addr %s504, 8
        %s506 = scalar_lea.vmem %s0, %s505
        %p507 = pneg %p50
        %p508 = pneg %p47
        %p509 = pneg %p71
        %p510 = pneg %p68
        %p511 = pneg %p92
        %p512 = pneg %p89
        %p513 = pneg %p113
        %p514 = pneg %p110
        %p515 = pneg %p134
        %p516 = pneg %p131
        %p517 = pneg %p155
        %p518 = pneg %p152
        %p519 = pneg %p176
        %p520 = pneg %p173
        %p521 = pneg %p197
        %p522 = pneg %p194
        %p523 = pneg %p218
        %p524 = pneg %p215
        %p525 = pneg %p239
        %p526 = pneg %p236
        %p527 = pneg %p260
        %p528 = pneg %p257
        %p529 = pneg %p281
        %p530 = pneg %p278
        %p531 = pneg %p302
        %p532 = pneg %p299
        %p533 = pneg %p323
        %p534 = pneg %p320
        %p535 = pneg %p344
        %p536 = pneg %p341
        %p537 = pneg %p370
        %p538 = pneg %p367
        %p539 = scmp.lt.s32.totalorder %s29, 1
        %s540 = scalar_select %p539, %s29, 1
        %s541 = smul.addr %s540, 8
        %s542 = scalar_lea.vmem %s15, %s541
        %p543 = scmp.lt.s32.totalorder %s29, 1
        %s544 = scalar_select %p543, %s29, 1
        %s545 = smul.addr %s544, 3
        %s546 = smul.addr %s545, 8
        %s547 = scalar_lea.vmem %s0, %s546
        %p548 = scmp.lt.s32.totalorder %s29, 1
        %s549 = scalar_select %p548, %s29, 1
        %s550 = smul.addr %s549, 8
        %s551 = scalar_lea.vmem %s15, %s550
        %v553 = vld [vmem:[%s547] sm:$0xff]
        %v554 = vld [vmem:[%s547 + $0x8] sm:$0xff]
        %v555 = vld [vmem:[%s547 + $0x10] sm:$0xff]
        %v556 = vpack.c.bf16 %v553, %v553
        %v557 = vpack.c.bf16 %v554, %v554
        %v558 = vpack.c.bf16 %v555, %v555
        %v559 = vld [vmem:[#allocation2] sm:$0xff]
        %v560 = vld [vmem:[#allocation2 + $0x8] sm:$0xff]
        %v561 = vld [vmem:[#allocation2 + $0x10] sm:$0xff]
        %v562 = vld [vmem:[#allocation2 + $0x18] sm:$0xff]
        %v563 = vld [vmem:[#allocation2 + $0x20] sm:$0xff]
        %v564 = vld [vmem:[#allocation2 + $0x28] sm:$0xff]
        %v565 = vld [vmem:[#allocation2 + $0x30] sm:$0xff]
        %v566 = vld [vmem:[#allocation2 + $0x38] sm:$0xff]
        %v567 = vld [vmem:[#allocation2 + $0x40] sm:$0xff]
        %v568 = vld [vmem:[#allocation2 + $0x48] sm:$0xff]
        %v569 = vld [vmem:[#allocation2 + $0x50] sm:$0xff]
        %v570 = vld [vmem:[#allocation2 + $0x58] sm:$0xff]
        %v571 = vld [vmem:[#allocation2 + $0x60] sm:$0xff]
        %v572 = vld [vmem:[#allocation2 + $0x68] sm:$0xff]
        %v573 = vld [vmem:[#allocation2 + $0x70] sm:$0xff]
        %v574 = vld [vmem:[#allocation2 + $0x78] sm:$0xff]
        %v575 = vld [vmem:[#allocation2 + $0x80] sm:$0xff]
        %v576 = vld [vmem:[#allocation2 + $0x88] sm:$0xff]
        %v577 = vld [vmem:[#allocation2 + $0x90] sm:$0xff]
        %v578 = vld [vmem:[#allocation2 + $0x98] sm:$0xff]
        %v579 = vld [vmem:[#allocation2 + $0xa0] sm:$0xff]
        %v580 = vld [vmem:[#allocation2 + $0xa8] sm:$0xff]
        %v581 = vld [vmem:[#allocation2 + $0xb0] sm:$0xff]
        %v582 = vld [vmem:[#allocation2 + $0xb8] sm:$0xff]
        %v583 = vld [vmem:[#allocation2 + $0xc0] sm:$0xff]
        %v584 = vld [vmem:[#allocation2 + $0xc8] sm:$0xff]
        %v585 = vld [vmem:[#allocation2 + $0xd0] sm:$0xff]
        %v586 = vld [vmem:[#allocation2 + $0xd8] sm:$0xff]
        %v587 = vld [vmem:[#allocation2 + $0xe0] sm:$0xff]
        %v588 = vld [vmem:[#allocation2 + $0xe8] sm:$0xff]
        %v589 = vld [vmem:[#allocation2 + $0xf0] sm:$0xff]
        %v590 = vld [vmem:[#allocation2 + $0xf8] sm:$0xff]
        %v591 = vld [vmem:[#allocation2 + $0x100] sm:$0xff]
        %v592 = vld [vmem:[#allocation2 + $0x108] sm:$0xff]
        %v593 = vld [vmem:[#allocation2 + $0x110] sm:$0xff]
        %v594 = vld [vmem:[#allocation2 + $0x118] sm:$0xff]
        %v595 = vld [vmem:[#allocation2 + $0x120] sm:$0xff]
        %v596 = vld [vmem:[#allocation2 + $0x128] sm:$0xff]
        %v597 = vld [vmem:[#allocation2 + $0x130] sm:$0xff]
        %v598 = vld [vmem:[#allocation2 + $0x138] sm:$0xff]
        %v599 = vld [vmem:[#allocation2 + $0x140] sm:$0xff]
        %v600 = vld [vmem:[#allocation2 + $0x148] sm:$0xff]
        %v601 = vld [vmem:[#allocation2 + $0x150] sm:$0xff]
        %v602 = vld [vmem:[#allocation2 + $0x158] sm:$0xff]
        %v603 = vld [vmem:[#allocation2 + $0x160] sm:$0xff]
        %v604 = vld [vmem:[#allocation2 + $0x168] sm:$0xff]
        %v605 = vld [vmem:[#allocation2 + $0x170] sm:$0xff]
        %v606 = vld [vmem:[#allocation2 + $0x178] sm:$0xff]
        %v655 = vunpack.c.l.b16 %v559
        %v656 = vunpack.c.h.b16 %v559
        %v657 = vunpack.c.l.b16 %v560
        %v658 = vunpack.c.h.b16 %v560
        %v659 = vunpack.c.l.b16 %v561
        %v660 = vunpack.c.h.b16 %v561
        %v661 = vunpack.c.l.b16 %v562
        %v662 = vunpack.c.h.b16 %v562
        %v663 = vunpack.c.l.b16 %v563
        %v664 = vunpack.c.h.b16 %v563
        %v665 = vunpack.c.l.b16 %v564
        %v666 = vunpack.c.h.b16 %v564
        %v667 = vunpack.c.l.b16 %v565
        %v668 = vunpack.c.h.b16 %v565
        %v669 = vunpack.c.l.b16 %v566
        %v670 = vunpack.c.h.b16 %v566
        %v671 = vunpack.c.l.b16 %v567
        %v672 = vunpack.c.h.b16 %v567
        %v673 = vunpack.c.l.b16 %v568
        %v674 = vunpack.c.h.b16 %v568
        %v675 = vunpack.c.l.b16 %v569
        %v676 = vunpack.c.h.b16 %v569
        %v677 = vunpack.c.l.b16 %v570
        %v678 = vunpack.c.h.b16 %v570
        %v679 = vunpack.c.l.b16 %v571
        %v680 = vunpack.c.h.b16 %v571
        %v681 = vunpack.c.l.b16 %v572
        %v682 = vunpack.c.h.b16 %v572
        %v683 = vunpack.c.l.b16 %v573
        %v684 = vunpack.c.h.b16 %v573
        %v685 = vunpack.c.l.b16 %v574
        %v686 = vunpack.c.h.b16 %v574
        %v687 = vunpack.c.l.b16 %v575
        %v688 = vunpack.c.h.b16 %v575
        %v689 = vunpack.c.l.b16 %v576
        %v690 = vunpack.c.h.b16 %v576
        %v691 = vunpack.c.l.b16 %v577
        %v692 = vunpack.c.h.b16 %v577
        %v693 = vunpack.c.l.b16 %v578
        %v694 = vunpack.c.h.b16 %v578
        %v695 = vunpack.c.l.b16 %v579
        %v696 = vunpack.c.h.b16 %v579
        %v697 = vunpack.c.l.b16 %v580
        %v698 = vunpack.c.h.b16 %v580
        %v699 = vunpack.c.l.b16 %v581
        %v700 = vunpack.c.h.b16 %v581
        %v701 = vunpack.c.l.b16 %v582
        %v702 = vunpack.c.h.b16 %v582
        %v703 = vunpack.c.l.b16 %v583
        %v704 = vunpack.c.h.b16 %v583
        %v705 = vunpack.c.l.b16 %v584
        %v706 = vunpack.c.h.b16 %v584
        %v707 = vunpack.c.l.b16 %v585
        %v708 = vunpack.c.h.b16 %v585
        %v709 = vunpack.c.l.b16 %v586
        %v710 = vunpack.c.h.b16 %v586
        %v711 = vunpack.c.l.b16 %v587
        %v712 = vunpack.c.h.b16 %v587
        %v713 = vunpack.c.l.b16 %v588
        %v714 = vunpack.c.h.b16 %v588
        %v715 = vunpack.c.l.b16 %v589
        %v716 = vunpack.c.h.b16 %v589
        %v717 = vunpack.c.l.b16 %v590
        %v718 = vunpack.c.h.b16 %v590
        %v719 = vunpack.c.l.b16 %v591
        %v720 = vunpack.c.h.b16 %v591
        %v721 = vunpack.c.l.b16 %v592
        %v722 = vunpack.c.h.b16 %v592
        %v723 = vunpack.c.l.b16 %v593
        %v724 = vunpack.c.h.b16 %v593
        %v725 = vunpack.c.l.b16 %v594
        %v726 = vunpack.c.h.b16 %v594
        %v727 = vunpack.c.l.b16 %v595
        %v728 = vunpack.c.h.b16 %v595
        %v729 = vunpack.c.l.b16 %v596
        %v730 = vunpack.c.h.b16 %v596
        %v731 = vunpack.c.l.b16 %v597
        %v732 = vunpack.c.h.b16 %v597
        %v733 = vunpack.c.l.b16 %v598
        %v734 = vunpack.c.h.b16 %v598
        %v735 = vunpack.c.l.b16 %v599
        %v736 = vunpack.c.h.b16 %v599
        %v737 = vunpack.c.l.b16 %v600
        %v738 = vunpack.c.h.b16 %v600
        %v739 = vunpack.c.l.b16 %v601
        %v740 = vunpack.c.h.b16 %v601
        %v741 = vunpack.c.l.b16 %v602
        %v742 = vunpack.c.h.b16 %v602
        %v743 = vunpack.c.l.b16 %v603
        %v744 = vunpack.c.h.b16 %v603
        %v745 = vunpack.c.l.b16 %v604
        %v746 = vunpack.c.h.b16 %v604
        %v747 = vunpack.c.l.b16 %v605
        %v748 = vunpack.c.h.b16 %v605
        %v749 = vunpack.c.l.b16 %v606
        %v750 = vunpack.c.h.b16 %v606
        %v751 = vpack.c.b16 %v657, %v655
        %v752 = vpack.c.b16 %v658, %v656
        %v753 = vpack.c.b16 %v661, %v659
        %v754 = vpack.c.b16 %v662, %v660
        %v755 = vpack.c.b16 %v665, %v663
        %v756 = vpack.c.b16 %v666, %v664
        %v757 = vpack.c.b16 %v669, %v667
        %v758 = vpack.c.b16 %v670, %v668
        %v759 = vpack.c.b16 %v673, %v671
        %v760 = vpack.c.b16 %v674, %v672
        %v761 = vpack.c.b16 %v677, %v675
        %v762 = vpack.c.b16 %v678, %v676
        %v763 = vpack.c.b16 %v681, %v679
        %v764 = vpack.c.b16 %v682, %v680
        %v765 = vpack.c.b16 %v685, %v683
        %v766 = vpack.c.b16 %v686, %v684
        %v767 = vpack.c.b16 %v689, %v687
        %v768 = vpack.c.b16 %v690, %v688
        %v769 = vpack.c.b16 %v693, %v691
        %v770 = vpack.c.b16 %v694, %v692
        %v771 = vpack.c.b16 %v697, %v695
        %v772 = vpack.c.b16 %v698, %v696
        %v773 = vpack.c.b16 %v701, %v699
        %v774 = vpack.c.b16 %v702, %v700
        %v775 = vpack.c.b16 %v705, %v703
        %v776 = vpack.c.b16 %v706, %v704
        %v777 = vpack.c.b16 %v709, %v707
        %v778 = vpack.c.b16 %v710, %v708
        %v779 = vpack.c.b16 %v713, %v711
        %v780 = vpack.c.b16 %v714, %v712
        %v781 = vpack.c.b16 %v717, %v715
        %v782 = vpack.c.b16 %v718, %v716
        %v783 = vpack.c.b16 %v721, %v719
        %v784 = vpack.c.b16 %v722, %v720
        %v785 = vpack.c.b16 %v725, %v723
        %v786 = vpack.c.b16 %v726, %v724
        %v787 = vpack.c.b16 %v729, %v727
        %v788 = vpack.c.b16 %v730, %v728
        %v789 = vpack.c.b16 %v733, %v731
        %v790 = vpack.c.b16 %v734, %v732
        %v791 = vpack.c.b16 %v737, %v735
        %v792 = vpack.c.b16 %v738, %v736
        %v793 = vpack.c.b16 %v741, %v739
        %v794 = vpack.c.b16 %v742, %v740
        %v795 = vpack.c.b16 %v745, %v743
        %v796 = vpack.c.b16 %v746, %v744
        %v797 = vpack.c.b16 %v749, %v747
        %v798 = vpack.c.b16 %v750, %v748
        %847 = vmatprep.subr.bf16.mxu0 %v752
        %848 = vmatpush1.bf16.msra.mxu0 %v751
        %849 = vmatprep.subr.bf16.mxu0 %v754
        %850 = vmatpush1.bf16.msra.mxu0 %v753
        %851 = vmatprep.subr.bf16.mxu0 %v756
        %852 = vmatpush1.bf16.msra.mxu0 %v755
        %853 = vmatprep.subr.bf16.mxu0 %v758
        %854 = vmatpush1.bf16.msra.mxu0 %v757
        %855 = vmatprep.subr.bf16.mxu0 %v760
        %856 = vmatpush1.bf16.msra.mxu0 %v759
        %857 = vmatprep.subr.bf16.mxu0 %v762
        %858 = vmatpush1.bf16.msra.mxu0 %v761
        %859 = vmatprep.subr.bf16.mxu0 %v764
        %860 = vmatpush1.bf16.msra.mxu0 %v763
        %861 = vmatprep.subr.bf16.mxu0 %v766
        %862 = vmatpush1.bf16.msra.mxu0 %v765
        %863 = vmatprep.subr.bf16.mxu0 %v768
        %864 = vmatpush1.bf16.msra.mxu0 %v767
        %865 = vmatprep.subr.bf16.mxu0 %v770
        %866 = vmatpush1.bf16.msra.mxu0 %v769
        %867 = vmatprep.subr.bf16.mxu0 %v772
        %868 = vmatpush1.bf16.msra.mxu0 %v771
        %869 = vmatprep.subr.bf16.mxu0 %v774
        %870 = vmatpush1.bf16.msra.mxu0 %v773
        %871 = vmatprep.subr.bf16.mxu0 %v776
        %872 = vmatpush1.bf16.msra.mxu0 %v775
        %873 = vmatprep.subr.bf16.mxu0 %v778
        %874 = vmatpush1.bf16.msra.mxu0 %v777
        %875 = vmatprep.subr.bf16.mxu0 %v780
        %876 = vmatpush1.bf16.msra.mxu0 %v779
        %877 = vmatprep.subr.bf16.mxu0 %v782
        %878 = vmatpush1.bf16.msra.mxu0 %v781
        %879 = vmatprep.mubr.bf16.mxu0 %v557
        %880 = vmatmul.mubr.bf16.gmra.mrb[0].mxu0 %v556
        %v881 = vpop.f32.mrb[0].mxu0
        %v882 = vadd.f32 0.0, %v881
        %v883 = vpop.f32.mrb[0].mxu0
        %v884 = vadd.f32 0.0, %v883
        %v885 = vpop.f32.mrb[0].mxu0
        %v886 = vpop.f32.mrb[0].mxu0
        %887 = vdwg.mxu0
        %888 = vmatprep.subr.bf16.mxu0 %v784
        %889 = vmatpush1.bf16.msra.mxu0 %v783
        %890 = vmatprep.subr.bf16.mxu0 %v786
        %891 = vmatpush1.bf16.msra.mxu0 %v785
        %892 = vmatprep.subr.bf16.mxu0 %v788
        %893 = vmatpush1.bf16.msra.mxu0 %v787
        %894 = vmatprep.subr.bf16.mxu0 %v790
        %895 = vmatpush1.bf16.msra.mxu0 %v789
        %896 = vmatprep.subr.bf16.mxu0 %v792
        %897 = vmatpush1.bf16.msra.mxu0 %v791
        %898 = vmatprep.subr.bf16.mxu0 %v794
        %899 = vmatpush1.bf16.msra.mxu0 %v793
        %900 = vmatprep.subr.bf16.mxu0 %v796
        %901 = vmatpush1.bf16.msra.mxu0 %v795
        %902 = vmatprep.subr.bf16.mxu0 %v798
        %903 = vmatpush1.bf16.msra.mxu0 %v797
        %904 = vmatprep.subr.bf16.mxu0 0
        %905 = vmatpush1.bf16.msra.mxu0 0
        %906 = vmatprep.subr.bf16.mxu0 0
        %907 = vmatpush1.bf16.msra.mxu0 0
        %908 = vmatprep.subr.bf16.mxu0 0
        %909 = vmatpush1.bf16.msra.mxu0 0
        %910 = vmatprep.subr.bf16.mxu0 0
        %911 = vmatpush1.bf16.msra.mxu0 0
        %912 = vmatprep.subr.bf16.mxu0 0
        %913 = vmatpush1.bf16.msra.mxu0 0
        %914 = vmatprep.subr.bf16.mxu0 0
        %915 = vmatpush1.bf16.msra.mxu0 0
        %916 = vmatprep.subr.bf16.mxu0 0
        %917 = vmatpush1.bf16.msra.mxu0 0
        %918 = vmatprep.subr.bf16.mxu0 0
        %919 = vmatpush1.bf16.msra.mxu0 0
        %920 = vmatprep.mubr.bf16.mxu0 0
        %921 = vmatmul.mubr.bf16.gmra.mrb[0].mxu0 %v558
        %v922 = vpop.f32.mrb[0].mxu0
        %v923 = vadd.f32 %v882, %v922
        %v924 = vpop.f32.mrb[0].mxu0
        %v925 = vadd.f32 %v884, %v924
        %v926 = vpop.f32.mrb[0].mxu0
        %v927 = vpop.f32.mrb[0].mxu0
        %928 = vdwg.mxu0
        %v929 = vld [vmem:[%s2] sm:$0x3]
        %v931 = vlaneseq
        %v932 = vshrl.u32 %v931, 7
        %v933 = vsub.s32 0, %v932
        %v934 = vrot.slane %v929, %v933
        %v935 = vlaneseq
        %v936 = vshrl.u32 %v935, 7
        %v937 = vsub.s32 1, %v936
        %v938 = vrot.slane %v929, %v937
        %v941 = vmul.f32 %v923, %v934
        %v942 = vmul.f32 %v925, %v938
        %v943 = vld [vmem:[%s3] sm:$0x3]
        %v945 = vlaneseq
        %v946 = vshrl.u32 %v945, 7
        %v947 = vsub.s32 0, %v946
        %v948 = vrot.slane %v943, %v947
        %v949 = vlaneseq
        %v950 = vshrl.u32 %v949, 7
        %v951 = vsub.s32 1, %v950
        %v952 = vrot.slane %v943, %v951
        %v955 = vadd.f32 %v941, %v948
        %v956 = vadd.f32 %v942, %v952
        %v957 = vmul.f32 %v955, 0.2
        %v958 = vmul.f32 %v956, 0.2
        %v959 = vmax.f32 %v955, %v957
        %v960 = vmax.f32 %v956, %v958
        %v961 = vpack.c.bf16 %v959, %v959
        %v962 = vpack.c.bf16 %v960, %v960
        %v963 = vld [vmem:[#allocation4] sm:$0xff]
        %v964 = vld [vmem:[#allocation4 + $0x8] sm:$0xff]
        %v965 = vld [vmem:[#allocation4 + $0x10] sm:$0xff]
        %v966 = vld [vmem:[#allocation4 + $0x18] sm:$0xff]
        %v967 = vld [vmem:[#allocation4 + $0x20] sm:$0xff]
        %v968 = vld [vmem:[#allocation4 + $0x28] sm:$0xff]
        %v969 = vld [vmem:[#allocation4 + $0x30] sm:$0xff]
        %v970 = vld [vmem:[#allocation4 + $0x38] sm:$0xff]
        %v971 = vld [vmem:[#allocation4 + $0x40] sm:$0xff]
        %v972 = vld [vmem:[#allocation4 + $0x48] sm:$0xff]
        %v973 = vld [vmem:[#allocation4 + $0x50] sm:$0xff]
        %v974 = vld [vmem:[#allocation4 + $0x58] sm:$0xff]
        %v975 = vld [vmem:[#allocation4 + $0x60] sm:$0xff]
        %v976 = vld [vmem:[#allocation4 + $0x68] sm:$0xff]
        %v977 = vld [vmem:[#allocation4 + $0x70] sm:$0xff]
        %v978 = vld [vmem:[#allocation4 + $0x78] sm:$0xff]
        %v979 = vld [vmem:[#allocation4 + $0x80] sm:$0xff]
        %v980 = vld [vmem:[#allocation4 + $0x88] sm:$0xff]
        %v981 = vld [vmem:[#allocation4 + $0x90] sm:$0xff]
        %v982 = vld [vmem:[#allocation4 + $0x98] sm:$0xff]
        %v983 = vld [vmem:[#allocation4 + $0xa0] sm:$0xff]
        %v984 = vld [vmem:[#allocation4 + $0xa8] sm:$0xff]
        %v985 = vld [vmem:[#allocation4 + $0xb0] sm:$0xff]
        %v986 = vld [vmem:[#allocation4 + $0xb8] sm:$0xff]
        %v987 = vld [vmem:[#allocation4 + $0xc0] sm:$0xff]
        %v988 = vld [vmem:[#allocation4 + $0xc8] sm:$0xff]
        %v989 = vld [vmem:[#allocation4 + $0xd0] sm:$0xff]
        %v990 = vld [vmem:[#allocation4 + $0xd8] sm:$0xff]
        %v991 = vld [vmem:[#allocation4 + $0xe0] sm:$0xff]
        %v992 = vld [vmem:[#allocation4 + $0xe8] sm:$0xff]
        %v993 = vld [vmem:[#allocation4 + $0xf0] sm:$0xff]
        %v994 = vld [vmem:[#allocation4 + $0xf8] sm:$0xff]
        %v1027 = vunpack.c.l.b16 %v963
        %v1028 = vunpack.c.h.b16 %v963
        %v1029 = vunpack.c.l.b16 %v964
        %v1030 = vunpack.c.h.b16 %v964
        %v1031 = vunpack.c.l.b16 %v965
        %v1032 = vunpack.c.h.b16 %v965
        %v1033 = vunpack.c.l.b16 %v966
        %v1034 = vunpack.c.h.b16 %v966
        %v1035 = vunpack.c.l.b16 %v967
        %v1036 = vunpack.c.h.b16 %v967
        %v1037 = vunpack.c.l.b16 %v968
        %v1038 = vunpack.c.h.b16 %v968
        %v1039 = vunpack.c.l.b16 %v969
        %v1040 = vunpack.c.h.b16 %v969
        %v1041 = vunpack.c.l.b16 %v970
        %v1042 = vunpack.c.h.b16 %v970
        %v1043 = vunpack.c.l.b16 %v971
        %v1044 = vunpack.c.h.b16 %v971
        %v1045 = vunpack.c.l.b16 %v972
        %v1046 = vunpack.c.h.b16 %v972
        %v1047 = vunpack.c.l.b16 %v973
        %v1048 = vunpack.c.h.b16 %v973
        %v1049 = vunpack.c.l.b16 %v974
        %v1050 = vunpack.c.h.b16 %v974
        %v1051 = vunpack.c.l.b16 %v975
        %v1052 = vunpack.c.h.b16 %v975
        %v1053 = vunpack.c.l.b16 %v976
        %v1054 = vunpack.c.h.b16 %v976
        %v1055 = vunpack.c.l.b16 %v977
        %v1056 = vunpack.c.h.b16 %v977
        %v1057 = vunpack.c.l.b16 %v978
        %v1058 = vunpack.c.h.b16 %v978
        %v1059 = vunpack.c.l.b16 %v979
        %v1060 = vunpack.c.h.b16 %v979
        %v1061 = vunpack.c.l.b16 %v980
        %v1062 = vunpack.c.h.b16 %v980
        %v1063 = vunpack.c.l.b16 %v981
        %v1064 = vunpack.c.h.b16 %v981
        %v1065 = vunpack.c.l.b16 %v982
        %v1066 = vunpack.c.h.b16 %v982
        %v1067 = vunpack.c.l.b16 %v983
        %v1068 = vunpack.c.h.b16 %v983
        %v1069 = vunpack.c.l.b16 %v984
        %v1070 = vunpack.c.h.b16 %v984
        %v1071 = vunpack.c.l.b16 %v985
        %v1072 = vunpack.c.h.b16 %v985
        %v1073 = vunpack.c.l.b16 %v986
        %v1074 = vunpack.c.h.b16 %v986
        %v1075 = vunpack.c.l.b16 %v987
        %v1076 = vunpack.c.h.b16 %v987
        %v1077 = vunpack.c.l.b16 %v988
        %v1078 = vunpack.c.h.b16 %v988
        %v1079 = vunpack.c.l.b16 %v989
        %v1080 = vunpack.c.h.b16 %v989
        %v1081 = vunpack.c.l.b16 %v990
        %v1082 = vunpack.c.h.b16 %v990
        %v1083 = vunpack.c.l.b16 %v991
        %v1084 = vunpack.c.h.b16 %v991
        %v1085 = vunpack.c.l.b16 %v992
        %v1086 = vunpack.c.h.b16 %v992
        %v1087 = vunpack.c.l.b16 %v993
        %v1088 = vunpack.c.h.b16 %v993
        %v1089 = vunpack.c.l.b16 %v994
        %v1090 = vunpack.c.h.b16 %v994
        %v1091 = vpack.c.b16 %v1029, %v1027
        %v1092 = vpack.c.b16 %v1030, %v1028
        %v1093 = vpack.c.b16 %v1033, %v1031
        %v1094 = vpack.c.b16 %v1034, %v1032
        %v1095 = vpack.c.b16 %v1037, %v1035
        %v1096 = vpack.c.b16 %v1038, %v1036
        %v1097 = vpack.c.b16 %v1041, %v1039
        %v1098 = vpack.c.b16 %v1042, %v1040
        %v1099 = vpack.c.b16 %v1045, %v1043
        %v1100 = vpack.c.b16 %v1046, %v1044
        %v1101 = vpack.c.b16 %v1049, %v1047
        %v1102 = vpack.c.b16 %v1050, %v1048
        %v1103 = vpack.c.b16 %v1053, %v1051
        %v1104 = vpack.c.b16 %v1054, %v1052
        %v1105 = vpack.c.b16 %v1057, %v1055
        %v1106 = vpack.c.b16 %v1058, %v1056
        %v1107 = vpack.c.b16 %v1061, %v1059
        %v1108 = vpack.c.b16 %v1062, %v1060
        %v1109 = vpack.c.b16 %v1065, %v1063
        %v1110 = vpack.c.b16 %v1066, %v1064
        %v1111 = vpack.c.b16 %v1069, %v1067
        %v1112 = vpack.c.b16 %v1070, %v1068
        %v1113 = vpack.c.b16 %v1073, %v1071
        %v1114 = vpack.c.b16 %v1074, %v1072
        %v1115 = vpack.c.b16 %v1077, %v1075
        %v1116 = vpack.c.b16 %v1078, %v1076
        %v1117 = vpack.c.b16 %v1081, %v1079
        %v1118 = vpack.c.b16 %v1082, %v1080
        %v1119 = vpack.c.b16 %v1085, %v1083
        %v1120 = vpack.c.b16 %v1086, %v1084
        %v1121 = vpack.c.b16 %v1089, %v1087
        %v1122 = vpack.c.b16 %v1090, %v1088
        %1155 = vmatprep.subr.bf16.mxu0 %v1092
        %1156 = vmatpush1.bf16.msra.mxu0 %v1091
        %1157 = vmatprep.subr.bf16.mxu0 %v1094
        %1158 = vmatpush1.bf16.msra.mxu0 %v1093
        %1159 = vmatprep.subr.bf16.mxu0 %v1096
        %1160 = vmatpush1.bf16.msra.mxu0 %v1095
        %1161 = vmatprep.subr.bf16.mxu0 %v1098
        %1162 = vmatpush1.bf16.msra.mxu0 %v1097
        %1163 = vmatprep.subr.bf16.mxu0 %v1100
        %1164 = vmatpush1.bf16.msra.mxu0 %v1099
        %1165 = vmatprep.subr.bf16.mxu0 %v1102
        %1166 = vmatpush1.bf16.msra.mxu0 %v1101
        %1167 = vmatprep.subr.bf16.mxu0 %v1104
        %1168 = vmatpush1.bf16.msra.mxu0 %v1103
        %1169 = vmatprep.subr.bf16.mxu0 %v1106
        %1170 = vmatpush1.bf16.msra.mxu0 %v1105
        %1171 = vmatprep.subr.bf16.mxu0 %v1108
        %1172 = vmatpush1.bf16.msra.mxu0 %v1107
        %1173 = vmatprep.subr.bf16.mxu0 %v1110
        %1174 = vmatpush1.bf16.msra.mxu0 %v1109
        %1175 = vmatprep.subr.bf16.mxu0 %v1112
        %1176 = vmatpush1.bf16.msra.mxu0 %v1111
        %1177 = vmatprep.subr.bf16.mxu0 %v1114
        %1178 = vmatpush1.bf16.msra.mxu0 %v1113
        %1179 = vmatprep.subr.bf16.mxu0 %v1116
        %1180 = vmatpush1.bf16.msra.mxu0 %v1115
        %1181 = vmatprep.subr.bf16.mxu0 %v1118
        %1182 = vmatpush1.bf16.msra.mxu0 %v1117
        %1183 = vmatprep.subr.bf16.mxu0 %v1120
        %1184 = vmatpush1.bf16.msra.mxu0 %v1119
        %1185 = vmatprep.subr.bf16.mxu0 %v1122
        %1186 = vmatpush1.bf16.msra.mxu0 %v1121
        %1187 = vmatprep.mubr.bf16.mxu0 %v962
        %1188 = vmatmul.mubr.bf16.gmra.mrb[0].mxu0 %v961
        %v1189 = vpop.f32.mrb[0].mxu0
        %v1190 = vadd.f32 0.0, %v1189
        %v1191 = vpop.f32.mrb[0].mxu0
        %v1192 = vadd.f32 0.0, %v1191
        %v1193 = vpop.f32.mrb[0].mxu0
        %v1194 = vpop.f32.mrb[0].mxu0
        %1195 = vdwg.mxu0
        %v1196 = vld [vmem:[%s5] sm:$0x3]
        %v1198 = vlaneseq
        %v1199 = vshrl.u32 %v1198, 7
        %v1200 = vsub.s32 0, %v1199
        %v1201 = vrot.slane %v1196, %v1200
        %v1202 = vlaneseq
        %v1203 = vshrl.u32 %v1202, 7
        %v1204 = vsub.s32 1, %v1203
        %v1205 = vrot.slane %v1196, %v1204
        %v1208 = vmul.f32 %v1190, %v1201
        %v1209 = vmul.f32 %v1192, %v1205
        %v1210 = vld [vmem:[%s6] sm:$0x3]
        %v1212 = vlaneseq
        %v1213 = vshrl.u32 %v1212, 7
        %v1214 = vsub.s32 0, %v1213
        %v1215 = vrot.slane %v1210, %v1214
        %v1216 = vlaneseq
        %v1217 = vshrl.u32 %v1216, 7
        %v1218 = vsub.s32 1, %v1217
        %v1219 = vrot.slane %v1210, %v1218
        %v1222 = vadd.f32 %v1208, %v1215
        %v1223 = vadd.f32 %v1209, %v1219
        %v1224 = vmul.f32 %v1222, 0.2
        %v1225 = vmul.f32 %v1223, 0.2
        %v1226 = vmax.f32 %v1222, %v1224
        %v1227 = vmax.f32 %v1223, %v1225
        %v1228 = vpack.c.bf16 %v1226, %v1226
        %v1229 = vpack.c.bf16 %v1227, %v1227
        %v1230 = vld [vmem:[#allocation6] sm:$0xff]
        %v1231 = vld [vmem:[#allocation6 + $0x8] sm:$0xff]
        %v1232 = vld [vmem:[#allocation6 + $0x10] sm:$0xff]
        %v1233 = vld [vmem:[#allocation6 + $0x18] sm:$0xff]
        %v1234 = vld [vmem:[#allocation6 + $0x20] sm:$0xff]
        %v1235 = vld [vmem:[#allocation6 + $0x28] sm:$0xff]
        %v1236 = vld [vmem:[#allocation6 + $0x30] sm:$0xff]
        %v1237 = vld [vmem:[#allocation6 + $0x38] sm:$0xff]
        %v1238 = vld [vmem:[#allocation6 + $0x40] sm:$0xff]
        %v1239 = vld [vmem:[#allocation6 + $0x48] sm:$0xff]
        %v1240 = vld [vmem:[#allocation6 + $0x50] sm:$0xff]
        %v1241 = vld [vmem:[#allocation6 + $0x58] sm:$0xff]
        %v1242 = vld [vmem:[#allocation6 + $0x60] sm:$0xff]
        %v1243 = vld [vmem:[#allocation6 + $0x68] sm:$0xff]
        %v1244 = vld [vmem:[#allocation6 + $0x70] sm:$0xff]
        %v1245 = vld [vmem:[#allocation6 + $0x78] sm:$0xff]
        %v1246 = vld [vmem:[#allocation6 + $0x80] sm:$0xff]
        %v1247 = vld [vmem:[#allocation6 + $0x88] sm:$0xff]
        %v1248 = vld [vmem:[#allocation6 + $0x90] sm:$0xff]
        %v1249 = vld [vmem:[#allocation6 + $0x98] sm:$0xff]
        %v1250 = vld [vmem:[#allocation6 + $0xa0] sm:$0xff]
        %v1251 = vld [vmem:[#allocation6 + $0xa8] sm:$0xff]
        %v1252 = vld [vmem:[#allocation6 + $0xb0] sm:$0xff]
        %v1253 = vld [vmem:[#allocation6 + $0xb8] sm:$0xff]
        %v1254 = vld [vmem:[#allocation6 + $0xc0] sm:$0xff]
        %v1255 = vld [vmem:[#allocation6 + $0xc8] sm:$0xff]
        %v1256 = vld [vmem:[#allocation6 + $0xd0] sm:$0xff]
        %v1257 = vld [vmem:[#allocation6 + $0xd8] sm:$0xff]
        %v1258 = vld [vmem:[#allocation6 + $0xe0] sm:$0xff]
        %v1259 = vld [vmem:[#allocation6 + $0xe8] sm:$0xff]
        %v1260 = vld [vmem:[#allocation6 + $0xf0] sm:$0xff]
        %v1261 = vld [vmem:[#allocation6 + $0xf8] sm:$0xff]
        %v1294 = vunpack.c.l.b16 %v1230
        %v1295 = vunpack.c.h.b16 %v1230
        %v1296 = vunpack.c.l.b16 %v1231
        %v1297 = vunpack.c.h.b16 %v1231
        %v1298 = vunpack.c.l.b16 %v1232
        %v1299 = vunpack.c.h.b16 %v1232
        %v1300 = vunpack.c.l.b16 %v1233
        %v1301 = vunpack.c.h.b16 %v1233
        %v1302 = vunpack.c.l.b16 %v1234
        %v1303 = vunpack.c.h.b16 %v1234
        %v1304 = vunpack.c.l.b16 %v1235
        %v1305 = vunpack.c.h.b16 %v1235
        %v1306 = vunpack.c.l.b16 %v1236
        %v1307 = vunpack.c.h.b16 %v1236
        %v1308 = vunpack.c.l.b16 %v1237
        %v1309 = vunpack.c.h.b16 %v1237
        %v1310 = vunpack.c.l.b16 %v1238
        %v1311 = vunpack.c.h.b16 %v1238
        %v1312 = vunpack.c.l.b16 %v1239
        %v1313 = vunpack.c.h.b16 %v1239
        %v1314 = vunpack.c.l.b16 %v1240
        %v1315 = vunpack.c.h.b16 %v1240
        %v1316 = vunpack.c.l.b16 %v1241
        %v1317 = vunpack.c.h.b16 %v1241
        %v1318 = vunpack.c.l.b16 %v1242
        %v1319 = vunpack.c.h.b16 %v1242
        %v1320 = vunpack.c.l.b16 %v1243
        %v1321 = vunpack.c.h.b16 %v1243
        %v1322 = vunpack.c.l.b16 %v1244
        %v1323 = vunpack.c.h.b16 %v1244
        %v1324 = vunpack.c.l.b16 %v1245
        %v1325 = vunpack.c.h.b16 %v1245
        %v1326 = vunpack.c.l.b16 %v1246
        %v1327 = vunpack.c.h.b16 %v1246
        %v1328 = vunpack.c.l.b16 %v1247
        %v1329 = vunpack.c.h.b16 %v1247
        %v1330 = vunpack.c.l.b16 %v1248
        %v1331 = vunpack.c.h.b16 %v1248
        %v1332 = vunpack.c.l.b16 %v1249
        %v1333 = vunpack.c.h.b16 %v1249
        %v1334 = vunpack.c.l.b16 %v1250
        %v1335 = vunpack.c.h.b16 %v1250
        %v1336 = vunpack.c.l.b16 %v1251
        %v1337 = vunpack.c.h.b16 %v1251
        %v1338 = vunpack.c.l.b16 %v1252
        %v1339 = vunpack.c.h.b16 %v1252
        %v1340 = vunpack.c.l.b16 %v1253
        %v1341 = vunpack.c.h.b16 %v1253
        %v1342 = vunpack.c.l.b16 %v1254
        %v1343 = vunpack.c.h.b16 %v1254
        %v1344 = vunpack.c.l.b16 %v1255
        %v1345 = vunpack.c.h.b16 %v1255
        %v1346 = vunpack.c.l.b16 %v1256
        %v1347 = vunpack.c.h.b16 %v1256
        %v1348 = vunpack.c.l.b16 %v1257
        %v1349 = vunpack.c.h.b16 %v1257
        %v1350 = vunpack.c.l.b16 %v1258
        %v1351 = vunpack.c.h.b16 %v1258
        %v1352 = vunpack.c.l.b16 %v1259
        %v1353 = vunpack.c.h.b16 %v1259
        %v1354 = vunpack.c.l.b16 %v1260
        %v1355 = vunpack.c.h.b16 %v1260
        %v1356 = vunpack.c.l.b16 %v1261
        %v1357 = vunpack.c.h.b16 %v1261
        %v1358 = vpack.c.b16 %v1296, %v1294
        %v1359 = vpack.c.b16 %v1297, %v1295
        %v1360 = vpack.c.b16 %v1300, %v1298
        %v1361 = vpack.c.b16 %v1301, %v1299
        %v1362 = vpack.c.b16 %v1304, %v1302
        %v1363 = vpack.c.b16 %v1305, %v1303
        %v1364 = vpack.c.b16 %v1308, %v1306
        %v1365 = vpack.c.b16 %v1309, %v1307
        %v1366 = vpack.c.b16 %v1312, %v1310
        %v1367 = vpack.c.b16 %v1313, %v1311
        %v1368 = vpack.c.b16 %v1316, %v1314
        %v1369 = vpack.c.b16 %v1317, %v1315
        %v1370 = vpack.c.b16 %v1320, %v1318
        %v1371 = vpack.c.b16 %v1321, %v1319
        %v1372 = vpack.c.b16 %v1324, %v1322
        %v1373 = vpack.c.b16 %v1325, %v1323
        %v1374 = vpack.c.b16 %v1328, %v1326
        %v1375 = vpack.c.b16 %v1329, %v1327
        %v1376 = vpack.c.b16 %v1332, %v1330
        %v1377 = vpack.c.b16 %v1333, %v1331
        %v1378 = vpack.c.b16 %v1336, %v1334
        %v1379 = vpack.c.b16 %v1337, %v1335
        %v1380 = vpack.c.b16 %v1340, %v1338
        %v1381 = vpack.c.b16 %v1341, %v1339
        %v1382 = vpack.c.b16 %v1344, %v1342
        %v1383 = vpack.c.b16 %v1345, %v1343
        %v1384 = vpack.c.b16 %v1348, %v1346
        %v1385 = vpack.c.b16 %v1349, %v1347
        %v1386 = vpack.c.b16 %v1352, %v1350
        %v1387 = vpack.c.b16 %v1353, %v1351
        %v1388 = vpack.c.b16 %v1356, %v1354
        %v1389 = vpack.c.b16 %v1357, %v1355
        %1422 = vmatprep.subr.bf16.mxu0 %v1359
        %1423 = vmatpush1.bf16.msra.mxu0 %v1358
        %1424 = vmatprep.subr.bf16.mxu0 %v1361
        %1425 = vmatpush1.bf16.msra.mxu0 %v1360
        %1426 = vmatprep.subr.bf16.mxu0 %v1363
        %1427 = vmatpush1.bf16.msra.mxu0 %v1362
        %1428 = vmatprep.subr.bf16.mxu0 %v1365
        %1429 = vmatpush1.bf16.msra.mxu0 %v1364
        %1430 = vmatprep.subr.bf16.mxu0 %v1367
        %1431 = vmatpush1.bf16.msra.mxu0 %v1366
        %1432 = vmatprep.subr.bf16.mxu0 %v1369
        %1433 = vmatpush1.bf16.msra.mxu0 %v1368
        %1434 = vmatprep.subr.bf16.mxu0 %v1371
        %1435 = vmatpush1.bf16.msra.mxu0 %v1370
        %1436 = vmatprep.subr.bf16.mxu0 %v1373
        %1437 = vmatpush1.bf16.msra.mxu0 %v1372
        %1438 = vmatprep.subr.bf16.mxu0 %v1375
        %1439 = vmatpush1.bf16.msra.mxu0 %v1374
        %1440 = vmatprep.subr.bf16.mxu0 %v1377
        %1441 = vmatpush1.bf16.msra.mxu0 %v1376
        %1442 = vmatprep.subr.bf16.mxu0 %v1379
        %1443 = vmatpush1.bf16.msra.mxu0 %v1378
        %1444 = vmatprep.subr.bf16.mxu0 %v1381
        %1445 = vmatpush1.bf16.msra.mxu0 %v1380
        %1446 = vmatprep.subr.bf16.mxu0 %v1383
        %1447 = vmatpush1.bf16.msra.mxu0 %v1382
        %1448 = vmatprep.subr.bf16.mxu0 %v1385
        %1449 = vmatpush1.bf16.msra.mxu0 %v1384
        %1450 = vmatprep.subr.bf16.mxu0 %v1387
        %1451 = vmatpush1.bf16.msra.mxu0 %v1386
        %1452 = vmatprep.subr.bf16.mxu0 %v1389
        %1453 = vmatpush1.bf16.msra.mxu0 %v1388
        %1454 = vmatprep.mubr.bf16.mxu0 %v1229
        %1455 = vmatmul.mubr.bf16.gmra.mrb[0].mxu0 %v1228
        %v1456 = vpop.f32.mrb[0].mxu0
        %v1457 = vadd.f32 0.0, %v1456
        %v1458 = vpop.f32.mrb[0].mxu0
        %v1459 = vadd.f32 0.0, %v1458
        %v1460 = vpop.f32.mrb[0].mxu0
        %v1461 = vpop.f32.mrb[0].mxu0
        %1462 = vdwg.mxu0
        %v1463 = vld [vmem:[%s8] sm:$0x3]
        %v1465 = vlaneseq
        %v1466 = vshrl.u32 %v1465, 7
        %v1467 = vsub.s32 0, %v1466
        %v1468 = vrot.slane %v1463, %v1467
        %v1469 = vlaneseq
        %v1470 = vshrl.u32 %v1469, 7
        %v1471 = vsub.s32 1, %v1470
        %v1472 = vrot.slane %v1463, %v1471
        %v1475 = vmul.f32 %v1457, %v1468
        %v1476 = vmul.f32 %v1459, %v1472
        %v1477 = vld [vmem:[%s9] sm:$0x3]
        %v1479 = vlaneseq
        %v1480 = vshrl.u32 %v1479, 7
        %v1481 = vsub.s32 0, %v1480
        %v1482 = vrot.slane %v1477, %v1481
        %v1483 = vlaneseq
        %v1484 = vshrl.u32 %v1483, 7
        %v1485 = vsub.s32 1, %v1484
        %v1486 = vrot.slane %v1477, %v1485
        %v1489 = vadd.f32 %v1475, %v1482
        %v1490 = vadd.f32 %v1476, %v1486
        %v1491 = vmul.f32 %v1489, 0.2
        %v1492 = vmul.f32 %v1490, 0.2
        %v1493 = vmax.f32 %v1489, %v1491
        %v1494 = vmax.f32 %v1490, %v1492
        %v1495 = vpack.c.bf16 %v1493, %v1493
        %v1496 = vpack.c.bf16 %v1494, %v1494
        %v1497 = vld [vmem:[#allocation7] sm:$0xff]
        %v1498 = vld [vmem:[#allocation7 + $0x8] sm:$0xff]
        %v1499 = vld [vmem:[#allocation7 + $0x10] sm:$0xff]
        %v1500 = vld [vmem:[#allocation7 + $0x18] sm:$0xff]
        %v1501 = vld [vmem:[#allocation7 + $0x20] sm:$0xff]
        %v1502 = vld [vmem:[#allocation7 + $0x28] sm:$0xff]
        %v1503 = vld [vmem:[#allocation7 + $0x30] sm:$0xff]
        %v1504 = vld [vmem:[#allocation7 + $0x38] sm:$0xff]
        %v1505 = vld [vmem:[#allocation7 + $0x40] sm:$0xff]
        %v1506 = vld [vmem:[#allocation7 + $0x48] sm:$0xff]
        %v1507 = vld [vmem:[#allocation7 + $0x50] sm:$0xff]
        %v1508 = vld [vmem:[#allocation7 + $0x58] sm:$0xff]
        %v1509 = vld [vmem:[#allocation7 + $0x60] sm:$0xff]
        %v1510 = vld [vmem:[#allocation7 + $0x68] sm:$0xff]
        %v1511 = vld [vmem:[#allocation7 + $0x70] sm:$0xff]
        %v1512 = vld [vmem:[#allocation7 + $0x78] sm:$0xff]
        %v1513 = vld [vmem:[#allocation7 + $0x80] sm:$0xff]
        %v1514 = vld [vmem:[#allocation7 + $0x88] sm:$0xff]
        %v1515 = vld [vmem:[#allocation7 + $0x90] sm:$0xff]
        %v1516 = vld [vmem:[#allocation7 + $0x98] sm:$0xff]
        %v1517 = vld [vmem:[#allocation7 + $0xa0] sm:$0xff]
        %v1518 = vld [vmem:[#allocation7 + $0xa8] sm:$0xff]
        %v1519 = vld [vmem:[#allocation7 + $0xb0] sm:$0xff]
        %v1520 = vld [vmem:[#allocation7 + $0xb8] sm:$0xff]
        %v1521 = vld [vmem:[#allocation7 + $0xc0] sm:$0xff]
        %v1522 = vld [vmem:[#allocation7 + $0xc8] sm:$0xff]
        %v1523 = vld [vmem:[#allocation7 + $0xd0] sm:$0xff]
        %v1524 = vld [vmem:[#allocation7 + $0xd8] sm:$0xff]
        %v1525 = vld [vmem:[#allocation7 + $0xe0] sm:$0xff]
        %v1526 = vld [vmem:[#allocation7 + $0xe8] sm:$0xff]
        %v1527 = vld [vmem:[#allocation7 + $0xf0] sm:$0xff]
        %v1528 = vld [vmem:[#allocation7 + $0xf8] sm:$0xff]
        %v1561 = vunpack.c.l.b16 %v1497
        %v1562 = vunpack.c.h.b16 %v1497
        %v1563 = vunpack.c.l.b16 %v1498
        %v1564 = vunpack.c.h.b16 %v1498
        %v1565 = vunpack.c.l.b16 %v1499
        %v1566 = vunpack.c.h.b16 %v1499
        %v1567 = vunpack.c.l.b16 %v1500
        %v1568 = vunpack.c.h.b16 %v1500
        %v1569 = vunpack.c.l.b16 %v1501
        %v1570 = vunpack.c.h.b16 %v1501
        %v1571 = vunpack.c.l.b16 %v1502
        %v1572 = vunpack.c.h.b16 %v1502
        %v1573 = vunpack.c.l.b16 %v1503
        %v1574 = vunpack.c.h.b16 %v1503
        %v1575 = vunpack.c.l.b16 %v1504
        %v1576 = vunpack.c.h.b16 %v1504
        %v1577 = vunpack.c.l.b16 %v1505
        %v1578 = vunpack.c.h.b16 %v1505
        %v1579 = vunpack.c.l.b16 %v1506
        %v1580 = vunpack.c.h.b16 %v1506
        %v1581 = vunpack.c.l.b16 %v1507
        %v1582 = vunpack.c.h.b16 %v1507
        %v1583 = vunpack.c.l.b16 %v1508
        %v1584 = vunpack.c.h.b16 %v1508
        %v1585 = vunpack.c.l.b16 %v1509
        %v1586 = vunpack.c.h.b16 %v1509
        %v1587 = vunpack.c.l.b16 %v1510
        %v1588 = vunpack.c.h.b16 %v1510
        %v1589 = vunpack.c.l.b16 %v1511
        %v1590 = vunpack.c.h.b16 %v1511
        %v1591 = vunpack.c.l.b16 %v1512
        %v1592 = vunpack.c.h.b16 %v1512
        %v1593 = vunpack.c.l.b16 %v1513
        %v1594 = vunpack.c.h.b16 %v1513
        %v1595 = vunpack.c.l.b16 %v1514
        %v1596 = vunpack.c.h.b16 %v1514
        %v1597 = vunpack.c.l.b16 %v1515
        %v1598 = vunpack.c.h.b16 %v1515
        %v1599 = vunpack.c.l.b16 %v1516
        %v1600 = vunpack.c.h.b16 %v1516
        %v1601 = vunpack.c.l.b16 %v1517
        %v1602 = vunpack.c.h.b16 %v1517
        %v1603 = vunpack.c.l.b16 %v1518
        %v1604 = vunpack.c.h.b16 %v1518
        %v1605 = vunpack.c.l.b16 %v1519
        %v1606 = vunpack.c.h.b16 %v1519
        %v1607 = vunpack.c.l.b16 %v1520
        %v1608 = vunpack.c.h.b16 %v1520
        %v1609 = vunpack.c.l.b16 %v1521
        %v1610 = vunpack.c.h.b16 %v1521
        %v1611 = vunpack.c.l.b16 %v1522
        %v1612 = vunpack.c.h.b16 %v1522
        %v1613 = vunpack.c.l.b16 %v1523
        %v1614 = vunpack.c.h.b16 %v1523
        %v1615 = vunpack.c.l.b16 %v1524
        %v1616 = vunpack.c.h.b16 %v1524
        %v1617 = vunpack.c.l.b16 %v1525
        %v1618 = vunpack.c.h.b16 %v1525
        %v1619 = vunpack.c.l.b16 %v1526
        %v1620 = vunpack.c.h.b16 %v1526
        %v1621 = vunpack.c.l.b16 %v1527
        %v1622 = vunpack.c.h.b16 %v1527
        %v1623 = vunpack.c.l.b16 %v1528
        %v1624 = vunpack.c.h.b16 %v1528
        %v1625 = vpack.c.b16 %v1563, %v1561
        %v1626 = vpack.c.b16 %v1564, %v1562
        %v1627 = vpack.c.b16 %v1567, %v1565
        %v1628 = vpack.c.b16 %v1568, %v1566
        %v1629 = vpack.c.b16 %v1571, %v1569
        %v1630 = vpack.c.b16 %v1572, %v1570
        %v1631 = vpack.c.b16 %v1575, %v1573
        %v1632 = vpack.c.b16 %v1576, %v1574
        %v1633 = vpack.c.b16 %v1579, %v1577
        %v1634 = vpack.c.b16 %v1580, %v1578
        %v1635 = vpack.c.b16 %v1583, %v1581
        %v1636 = vpack.c.b16 %v1584, %v1582
        %v1637 = vpack.c.b16 %v1587, %v1585
        %v1638 = vpack.c.b16 %v1588, %v1586
        %v1639 = vpack.c.b16 %v1591, %v1589
        %v1640 = vpack.c.b16 %v1592, %v1590
        %v1641 = vpack.c.b16 %v1595, %v1593
        %v1642 = vpack.c.b16 %v1596, %v1594
        %v1643 = vpack.c.b16 %v1599, %v1597
        %v1644 = vpack.c.b16 %v1600, %v1598
        %v1645 = vpack.c.b16 %v1603, %v1601
        %v1646 = vpack.c.b16 %v1604, %v1602
        %v1647 = vpack.c.b16 %v1607, %v1605
        %v1648 = vpack.c.b16 %v1608, %v1606
        %v1649 = vpack.c.b16 %v1611, %v1609
        %v1650 = vpack.c.b16 %v1612, %v1610
        %v1651 = vpack.c.b16 %v1615, %v1613
        %v1652 = vpack.c.b16 %v1616, %v1614
        %v1653 = vpack.c.b16 %v1619, %v1617
        %v1654 = vpack.c.b16 %v1620, %v1618
        %v1655 = vpack.c.b16 %v1623, %v1621
        %v1656 = vpack.c.b16 %v1624, %v1622
        %1689 = vmatprep.subr.bf16.mxu0 %v1626
        %1690 = vmatpush1.bf16.msra.mxu0 %v1625
        %1691 = vmatprep.subr.bf16.mxu0 %v1628
        %1692 = vmatpush1.bf16.msra.mxu0 %v1627
        %1693 = vmatprep.subr.bf16.mxu0 %v1630
        %1694 = vmatpush1.bf16.msra.mxu0 %v1629
        %1695 = vmatprep.subr.bf16.mxu0 %v1632
        %1696 = vmatpush1.bf16.msra.mxu0 %v1631
        %1697 = vmatprep.subr.bf16.mxu0 %v1634
        %1698 = vmatpush1.bf16.msra.mxu0 %v1633
        %1699 = vmatprep.subr.bf16.mxu0 %v1636
        %1700 = vmatpush1.bf16.msra.mxu0 %v1635
        %1701 = vmatprep.subr.bf16.mxu0 %v1638
        %1702 = vmatpush1.bf16.msra.mxu0 %v1637
        %1703 = vmatprep.subr.bf16.mxu0 %v1640
        %1704 = vmatpush1.bf16.msra.mxu0 %v1639
        %1705 = vmatprep.subr.bf16.mxu0 %v1642
        %1706 = vmatpush1.bf16.msra.mxu0 %v1641
        %1707 = vmatprep.subr.bf16.mxu0 %v1644
        %1708 = vmatpush1.bf16.msra.mxu0 %v1643
        %1709 = vmatprep.subr.bf16.mxu0 %v1646
        %1710 = vmatpush1.bf16.msra.mxu0 %v1645
        %1711 = vmatprep.subr.bf16.mxu0 %v1648
        %1712 = vmatpush1.bf16.msra.mxu0 %v1647
        %1713 = vmatprep.subr.bf16.mxu0 %v1650
        %1714 = vmatpush1.bf16.msra.mxu0 %v1649
        %1715 = vmatprep.subr.bf16.mxu0 %v1652
        %1716 = vmatpush1.bf16.msra.mxu0 %v1651
        %1717 = vmatprep.subr.bf16.mxu0 %v1654
        %1718 = vmatpush1.bf16.msra.mxu0 %v1653
        %1719 = vmatprep.subr.bf16.mxu0 %v1656
        %1720 = vmatpush1.bf16.msra.mxu0 %v1655
        %1721 = vmatprep.mubr.bf16.mxu0 %v1496
        %1722 = vmatmul.mubr.bf16.gmra.mrb[0].mxu0 %v1495
        %v1723 = vpop.f32.mrb[0].mxu0
        %v1724 = vadd.f32 0.0, %v1723
        %v1725 = vpop.f32.mrb[0].mxu0
        %v1726 = vadd.f32 0.0, %v1725
        %v1727 = vpop.f32.mrb[0].mxu0
        %v1728 = vpop.f32.mrb[0].mxu0
        %1729 = vdwg.mxu0
        %v1730 = vld [vmem:[%s11] sm:$0x3]
        %v1732 = vlaneseq
        %v1733 = vshrl.u32 %v1732, 7
        %v1734 = vsub.s32 0, %v1733
        %v1735 = vrot.slane %v1730, %v1734
        %v1736 = vlaneseq
        %v1737 = vshrl.u32 %v1736, 7
        %v1738 = vsub.s32 1, %v1737
        %v1739 = vrot.slane %v1730, %v1738
        %v1742 = vmul.f32 %v1724, %v1735
        %v1743 = vmul.f32 %v1726, %v1739
        %v1744 = vld [vmem:[%s12] sm:$0x3]
        %v1746 = vlaneseq
        %v1747 = vshrl.u32 %v1746, 7
        %v1748 = vsub.s32 0, %v1747
        %v1749 = vrot.slane %v1744, %v1748
        %v1750 = vlaneseq
        %v1751 = vshrl.u32 %v1750, 7
        %v1752 = vsub.s32 1, %v1751
        %v1753 = vrot.slane %v1744, %v1752
        %v1756 = vadd.f32 %v1742, %v1749
        %v1757 = vadd.f32 %v1743, %v1753
        %v1758 = vmul.f32 %v1756, 0.2
        %v1759 = vmul.f32 %v1757, 0.2
        %v1760 = vmax.f32 %v1756, %v1758
        %v1761 = vmax.f32 %v1757, %v1759
        %v1762 = vpack.c.bf16 %v1760, %v1760
        %v1763 = vpack.c.bf16 %v1761, %v1761
        %v1764 = vld [vmem:[%s13] sm:$0xf]
        %v1765 = vld [vmem:[%s13 + $0x4] sm:$0xf]
        %v1766 = vld [vmem:[%s13 + $0x8] sm:$0xf]
        %v1767 = vld [vmem:[%s13 + $0xc] sm:$0xf]
        %v1768 = vld [vmem:[%s13 + $0x10] sm:$0xf]
        %v1769 = vld [vmem:[%s13 + $0x14] sm:$0xf]
        %v1770 = vld [vmem:[%s13 + $0x18] sm:$0xf]
        %v1771 = vld [vmem:[%s13 + $0x1c] sm:$0xf]
        %v1772 = vld [vmem:[%s13 + $0x20] sm:$0xf]
        %v1773 = vld [vmem:[%s13 + $0x24] sm:$0xf]
        %v1774 = vld [vmem:[%s13 + $0x28] sm:$0xf]
        %v1775 = vld [vmem:[%s13 + $0x2c] sm:$0xf]
        %v1776 = vld [vmem:[%s13 + $0x30] sm:$0xf]
        %v1777 = vld [vmem:[%s13 + $0x34] sm:$0xf]
        %v1778 = vld [vmem:[%s13 + $0x38] sm:$0xf]
        %v1779 = vld [vmem:[%s13 + $0x3c] sm:$0xf]
        %v1780 = vld [vmem:[%s13 + $0x40] sm:$0xf]
        %v1781 = vld [vmem:[%s13 + $0x44] sm:$0xf]
        %v1782 = vld [vmem:[%s13 + $0x48] sm:$0xf]
        %v1783 = vld [vmem:[%s13 + $0x4c] sm:$0xf]
        %v1784 = vld [vmem:[%s13 + $0x50] sm:$0xf]
        %v1785 = vld [vmem:[%s13 + $0x54] sm:$0xf]
        %v1786 = vld [vmem:[%s13 + $0x58] sm:$0xf]
        %v1787 = vld [vmem:[%s13 + $0x5c] sm:$0xf]
        %v1788 = vld [vmem:[%s13 + $0x60] sm:$0xf]
        %v1789 = vld [vmem:[%s13 + $0x64] sm:$0xf]
        %v1790 = vld [vmem:[%s13 + $0x68] sm:$0xf]
        %v1791 = vld [vmem:[%s13 + $0x6c] sm:$0xf]
        %v1792 = vld [vmem:[%s13 + $0x70] sm:$0xf]
        %v1793 = vld [vmem:[%s13 + $0x74] sm:$0xf]
        %v1794 = vld [vmem:[%s13 + $0x78] sm:$0xf]
        %v1795 = vld [vmem:[%s13 + $0x7c] sm:$0xf]
        %v1796 = vld [vmem:[%s14] sm:$0x1]
        %v1798 = vlaneseq
        %v1799 = vshrl.u32 %v1798, 7
        %v1800 = vsub.s32 0, %v1799
        %v1801 = vrot.slane %v1796, %v1800
        %v1835 = vunpack.c.l.b16 %v1764
        %v1836 = vunpack.c.l.b16 %v1765
        %v1837 = vunpack.c.l.b16 %v1766
        %v1838 = vunpack.c.l.b16 %v1767
        %v1839 = vunpack.c.l.b16 %v1768
        %v1840 = vunpack.c.l.b16 %v1769
        %v1841 = vunpack.c.l.b16 %v1770
        %v1842 = vunpack.c.l.b16 %v1771
        %v1843 = vunpack.c.l.b16 %v1772
        %v1844 = vunpack.c.l.b16 %v1773
        %v1845 = vunpack.c.l.b16 %v1774
        %v1846 = vunpack.c.l.b16 %v1775
        %v1847 = vunpack.c.l.b16 %v1776
        %v1848 = vunpack.c.l.b16 %v1777
        %v1849 = vunpack.c.l.b16 %v1778
        %v1850 = vunpack.c.l.b16 %v1779
        %v1851 = vunpack.c.l.b16 %v1780
        %v1852 = vunpack.c.l.b16 %v1781
        %v1853 = vunpack.c.l.b16 %v1782
        %v1854 = vunpack.c.l.b16 %v1783
        %v1855 = vunpack.c.l.b16 %v1784
        %v1856 = vunpack.c.l.b16 %v1785
        %v1857 = vunpack.c.l.b16 %v1786
        %v1858 = vunpack.c.l.b16 %v1787
        %v1859 = vunpack.c.l.b16 %v1788
        %v1860 = vunpack.c.l.b16 %v1789
        %v1861 = vunpack.c.l.b16 %v1790
        %v1862 = vunpack.c.l.b16 %v1791
        %v1863 = vunpack.c.l.b16 %v1792
        %v1864 = vunpack.c.l.b16 %v1793
        %v1865 = vunpack.c.l.b16 %v1794
        %v1866 = vunpack.c.l.b16 %v1795
        %v1867 = vpack.c.b16 %v1836, %v1835
        %v1868 = vpack.c.b16 %v1838, %v1837
        %v1869 = vpack.c.b16 %v1840, %v1839
        %v1870 = vpack.c.b16 %v1842, %v1841
        %v1871 = vpack.c.b16 %v1844, %v1843
        %v1872 = vpack.c.b16 %v1846, %v1845
        %v1873 = vpack.c.b16 %v1848, %v1847
        %v1874 = vpack.c.b16 %v1850, %v1849
        %v1875 = vpack.c.b16 %v1852, %v1851
        %v1876 = vpack.c.b16 %v1854, %v1853
        %v1877 = vpack.c.b16 %v1856, %v1855
        %v1878 = vpack.c.b16 %v1858, %v1857
        %v1879 = vpack.c.b16 %v1860, %v1859
        %v1880 = vpack.c.b16 %v1862, %v1861
        %v1881 = vpack.c.b16 %v1864, %v1863
        %v1882 = vpack.c.b16 %v1866, %v1865
        %1899 = vmatprep.subr.bf16.mxu0 0
        %1900 = vmatpush1.bf16.msra.mxu0 %v1867
        %1901 = vmatprep.subr.bf16.mxu0 0
        %1902 = vmatpush1.bf16.msra.mxu0 %v1868
        %1903 = vmatprep.subr.bf16.mxu0 0
        %1904 = vmatpush1.bf16.msra.mxu0 %v1869
        %1905 = vmatprep.subr.bf16.mxu0 0
        %1906 = vmatpush1.bf16.msra.mxu0 %v1870
        %1907 = vmatprep.subr.bf16.mxu0 0
        %1908 = vmatpush1.bf16.msra.mxu0 %v1871
        %1909 = vmatprep.subr.bf16.mxu0 0
        %1910 = vmatpush1.bf16.msra.mxu0 %v1872
        %1911 = vmatprep.subr.bf16.mxu0 0
        %1912 = vmatpush1.bf16.msra.mxu0 %v1873
        %1913 = vmatprep.subr.bf16.mxu0 0
        %1914 = vmatpush1.bf16.msra.mxu0 %v1874
        %1915 = vmatprep.subr.bf16.mxu0 0
        %1916 = vmatpush1.bf16.msra.mxu0 %v1875
        %1917 = vmatprep.subr.bf16.mxu0 0
        %1918 = vmatpush1.bf16.msra.mxu0 %v1876
        %1919 = vmatprep.subr.bf16.mxu0 0
        %1920 = vmatpush1.bf16.msra.mxu0 %v1877
        %1921 = vmatprep.subr.bf16.mxu0 0
        %1922 = vmatpush1.bf16.msra.mxu0 %v1878
        %1923 = vmatprep.subr.bf16.mxu0 0
        %1924 = vmatpush1.bf16.msra.mxu0 %v1879
        %1925 = vmatprep.subr.bf16.mxu0 0
        %1926 = vmatpush1.bf16.msra.mxu0 %v1880
        %1927 = vmatprep.subr.bf16.mxu0 0
        %1928 = vmatpush1.bf16.msra.mxu0 %v1881
        %1929 = vmatprep.subr.bf16.mxu0 0
        %1930 = vmatpush1.bf16.msra.mxu0 %v1882
        %1931 = vmatprep.mubr.bf16.mxu0 %v1763
        %1932 = vmatmul.mubr.bf16.gmra.mrb[0].mxu0 %v1762
        %v1933 = vpop.f32.mrb[0].mxu0
        %v1934 = vadd.f32 %v1801, %v1933
        %v1935 = vpop.f32.mrb[0].mxu0
        %v1936 = vpop.f32.mrb[0].mxu0
        %v1937 = vpop.f32.mrb[0].mxu0
        %1938 = vdwg.mxu0
        %1939 = vst [vmem:[%s551] sm:$0xff] %v1934
        %p1940 = scmp.lt.s32.totalorder %s29, 1
        %s1941 = scalar_select %p1940, %s29, 1
        %s1942 = smul.addr %s1941, 8
        %s1943 = scalar_lea.vmem %s15, %s1942
        // Predicated region
        $region97: #{smirk_emo_forward.1} parent=79 // pred_check
          %p1944 = pneg %p367
        $region98: #{smirk_emo_forward.1} parent=79 // pred_check_branch
          %1946 = sbr.rel (%p1944) target = $region100
        $region99: #{smirk_emo_forward.1} parent=79 // pred_region
          _
        $region100: #{smirk_emo_forward.1} parent=79 // pred_fallthru
          _
      $region80: #{smirk_emo_forward.1} parent=5 // pred_fallthru
        _
      %p1947 = scmp.le.s32.totalorder 2, %s24
      // Predicated region
      $region101: #{smirk_emo_forward.1} parent=5 // pred_check
        %p1948 = pneg %p1947
      $region102: #{smirk_emo_forward.1} parent=5 // pred_check_branch
        %1950 = sbr.rel (%p1948) target = $region104
      $region103: #{smirk_emo_forward.1} parent=5 // pred_region
        %s1951 = ssub.s32 %s24, 2
        // Predicated region
        $region105: #{smirk_emo_forward.1} parent=103 // pred_check
          %p1952 = pneg %p373
        $region106: #{smirk_emo_forward.1} parent=103 // pred_check_branch
          %1954 = sbr.rel (%p1952) target = $region108
        $region107: #{smirk_emo_forward.1} parent=103 // pred_region
          %p1955 = scmp.lt.s32.totalorder %s30, 1
          %s1956 = scalar_select %p1955, %s30, 1
          %s1957 = smul.addr %s1956, 8
          %s1958 = scalar_lea.vmem %s15, %s1957
        $region108: #{smirk_emo_forward.1} parent=103 // pred_fallthru
          _
      $region104: #{smirk_emo_forward.1} parent=5 // pred_fallthru
        _
    $region6: #{smirk_emo_forward.1} parent=1 // loop_footer
      %s28 = sadd.s32 1, %s24
    $region7: #{smirk_emo_forward.1} parent=1 // loop_footer_branch
      %23 = sbr.rel target = $region3
    $region8: #{smirk_emo_forward.1} parent=1 // loop_exit
      _
    %1959 = vsyncpa [#allocation3], 1
    %s1960 = scalar_lea.sflag [#allocation3], 1
    %1961 = vsyncpa %s1960, 1
    %1962 = vsyncpa [#allocation5], 1
    %1963 = vsyncpa [#allocation8], 1

</llo_original>
